<compile_context>
chip_gen: v6e
topology: v6e:2x2x1
jax: 0.10.0
libtpu: 0.0.40
codegen_flags: <defaults>
</compile_context>

<pallas_src>
import math
from functools import partial

import jax
import jax.numpy as jnp
from jax import lax
from jax.experimental import pallas as pl
from jax.experimental.pallas import tpu as pltpu


def _sigmoid(x):
    # exp on the EUP + approx reciprocal on the EUP (no VALU divide).
    return pl.reciprocal(1.0 + jnp.exp(-x), approx=True)


def _silu(x):
    return x * _sigmoid(x)


def mha_kernel(x_ref, gating_w_ref, gating_b_ref, mw1_ref, mw2_ref,
               wq_ref, bq_ref, wk_ref, bk_ref, wv_ref, bv_ref,
               wg_ref, bg_ref, wd_ref, bd_ref, ln_g_ref, ln_b_ref,
               c1_ref, o_ref, *, n_heads, head_dim, eps):
    L, H = x_ref.shape[1], x_ref.shape[2]
    x = x_ref[0, :, :]                                   # (L, H), H = 128 -> lane-dense

    # ---- input gating branch: x_raw = x * sigmoid(x @ W_gating + b) ------------------
    g_lin = jnp.dot(x, gating_w_ref[...], preferred_element_type=jnp.float32)
    x_raw = x * _sigmoid(g_lin + gating_b_ref[...])

    # ---- metric mix + item similarity (F.normalize over the sequence dim, eps=1e-12) --
    # torch.stack((w1*x, w2*x)).mean(0) == x * 0.5*(w1 + w2)
    wm = 0.5 * (mw1_ref[...] + mw2_ref[...])             # (1, H)
    xm = x_raw * wm                                      # (L, H)
    ssq = jnp.sum(xm * xm, axis=0, keepdims=True)        # (1, H)
    # xm / max(||xm||_2, 1e-12)  ==  xm * rsqrt(max(sum_sq, 1e-24))   (rsqrt -> EUP)
    z = xm * lax.rsqrt(jnp.maximum(ssq, 1e-24))
    sim = jnp.einsum('lh,mh->lm', z, z, preferred_element_type=jnp.float32)   # (L, L)
    sim = jnp.where(sim < 0.0, 0.01, sim)
    # Hoisted once (was recomputed per head): c1 = softmax(weights)[1] / sqrt(head_dim).
    sim_scaled = c1_ref[0] * sim

    # ---- Q/K/V projections (c0 pre-folded into wq AND bq on the host) -----------------
    q = jnp.dot(x, wq_ref[...], preferred_element_type=jnp.float32) + bq_ref[...]
    k = jnp.dot(x, wk_ref[...], preferred_element_type=jnp.float32) + bk_ref[...]
    v = jnp.dot(x, wv_ref[...], preferred_element_type=jnp.float32) + bv_ref[...]

    # ---- all-head attention at full 128-lane width -------------------------------------
    # Per-head K/V via an iota column mask (masked-out columns contribute exact zeros),
    # so there are no 32-lane slices, no scratch stores, no concat/transpose.
    lane = lax.broadcasted_iota(jnp.int32, (L, H), 1)    # hoisted out of the head loop
    ctx = None
    for h in range(n_heads):                              # small static head count
        lo = h * head_dim
        head_cols = (lane >= lo) & (lane < lo + head_dim)
        k_h = jnp.where(head_cols, k, 0.0)                # (L, H), zeros outside head h
        v_h = jnp.where(head_cols, v, 0.0)
        s = jnp.einsum('lh,mh->lm', q, k_h,
                       preferred_element_type=jnp.float32)       # (L, L)
        s = s + sim_scaled
        m = jnp.max(s, axis=-1, keepdims=True)
        e = jnp.exp(s - m)
        inv = pl.reciprocal(jnp.sum(e, axis=-1, keepdims=True), approx=True)   # EUP
        p = e * inv                                       # attn_dropout = identity
        contrib = jnp.dot(p, v_h, preferred_element_type=jnp.float32)   # (L, H)
        ctx = contrib if ctx is None else ctx + contrib   # only head h's columns non-zero

    # ---- SiLU gate, output projection, residual, LayerNorm -----------------------------
    gate = _silu(jnp.dot(ctx, wg_ref[...], preferred_element_type=jnp.float32)
                 + bg_ref[...])
    hs = jnp.dot(ctx * gate, wd_ref[...], preferred_element_type=jnp.float32) + bd_ref[...]
    hs = hs + x                                           # out_dropout = identity

    mean = jnp.mean(hs, axis=-1, keepdims=True)
    var = jnp.mean((hs - mean) ** 2, axis=-1, keepdims=True)
    out = (hs - mean) * lax.rsqrt(var + eps) * ln_g_ref[...] + ln_b_ref[...]
    o_ref[0, :, :] = out                                  # lane-dense store (H = 128)


WEIGHT_ORDER = ['gating_w', 'gating_b', 'metric_w1', 'metric_w2',
                'wq', 'bq', 'wk', 'bk', 'wv', 'bv',
                'w_gate', 'b_gate', 'w_dense', 'b_dense', 'ln_g', 'ln_b']


def multi_head_attention(x, p, *, n_heads, layer_norm_eps):
    B, L, H = x.shape
    assert H % n_heads == 0
    dh = H // n_heads

    # Host-side folding of softmax(self.weights) and 1/sqrt(head_dim):
    #   c0 -> scaled into the Q projection (weight AND bias), c1 -> single SMEM scalar.
    mix = jax.nn.softmax(p['weights'].astype(jnp.float32))
    c0 = mix[0] / math.sqrt(dh)
    c1 = (mix[1] / math.sqrt(dh)).reshape(1).astype(jnp.float32)

    weights = dict(p)
    weights['wq'] = (p['wq'] * c0).astype(jnp.float32)
    weights['bq'] = (p['bq'] * c0).astype(jnp.float32)

    kernel = partial(mha_kernel, n_heads=n_heads, head_dim=dh, eps=layer_norm_eps)

    def resident(a):
        # Whole-array block with a constant index_map: weights stay VMEM-resident
        # across the batch grid steps (DMA'd once, never re-streamed).
        nd = a.ndim
        return pl.BlockSpec(a.shape, lambda b, _nd=nd: (0,) * _nd)

    in_specs = [pl.BlockSpec((1, L, H), lambda b: (b, 0, 0))]          # per-batch row block
    in_specs += [resident(weights[kname]) for kname in WEIGHT_ORDER]
    in_specs += [pl.BlockSpec(memory_space=pltpu.MemorySpace.SMEM)]    # c1 scalar

    return pl.pallas_call(
        kernel,
        out_shape=jax.ShapeDtypeStruct((B, L, H), jnp.float32),
        grid=(B,),                                   # "parallel" -> both v7x TensorCores
        in_specs=in_specs,
        out_specs=pl.BlockSpec((1, L, H), lambda b: (b, 0, 0)),
        compiler_params=pltpu.CompilerParams(dimension_semantics=("parallel",)),
    )(x, *[weights[kname] for kname in WEIGHT_ORDER], c1)


def multi_head_attention_ref(x, p, *, n_heads, layer_norm_eps):
    """Pure-JAX reference with PyTorch-identical semantics (sanity check)."""
    B, L, H = x.shape
    dh = H // n_heads

    x_raw = x * jax.nn.sigmoid(jnp.einsum('blh,hk->blk', x, p['gating_w'])
                               + p['gating_b'][None])
    x_m = jnp.stack((p['metric_w1'][None] * x_raw,
                     p['metric_w2'][None] * x_raw)).mean(0)
    nrm = jnp.linalg.norm(x_m, axis=1, keepdims=True)                 # F.normalize dim=1
    z = x_m / jnp.maximum(nrm, 1e-12)
    item_sim = jnp.einsum('blh,bmh->blm', z, z)
    item_sim = jnp.where(item_sim < 0, 0.01, item_sim)

    q = (jnp.einsum('blh,hk->blk', x, p['wq']) + p['bq'][None]).reshape(B, L, n_heads, dh)
    k = (jnp.einsum('blh,hk->blk', x, p['wk']) + p['bk'][None]).reshape(B, L, n_heads, dh)
    v = (jnp.einsum('blh,hk->blk', x, p['wv']) + p['bv'][None]).reshape(B, L, n_heads, dh)
    scores = jnp.einsum('blnd,bmnd->bnlm', q, k)
    mix = jax.nn.softmax(p['weights'])
    scores = (mix[0] * scores + mix[1] * item_sim[:, None]) / math.sqrt(dh)
    probs = jax.nn.softmax(scores, axis=-1)
    ctx = jnp.einsum('bnlm,bmnd->blnd', probs, v).reshape(B, L, H)

    gate = jax.nn.silu(jnp.einsum('blh,hk->blk', ctx, p['w_gate']) + p['b_gate'][None])
    hs = jnp.einsum('blh,hk->blk', ctx * gate, p['w_dense']) + p['b_dense'][None]
    hs = hs + x
    mean = hs.mean(-1, keepdims=True)
    var = ((hs - mean) ** 2).mean(-1, keepdims=True)
    return (hs - mean) / jnp.sqrt(var + layer_norm_eps) * p['ln_g'][None] + p['ln_b'][None]


if __name__ == "__main__":
    B, L = 2, 8
    n_heads, hidden_size = 4, 128          # H = 128 -> naturally lane-dense output
    hidden_dropout_prob = attn_dropout_prob = 0.1   # dropout == identity (inference)
    layer_norm_eps = 1e-12

    H = hidden_size
    key = jax.random.PRNGKey(0)
    ks = jax.random.split(key, 17)
    s = 1.0 / math.sqrt(H)

    # Deterministic synthetic parameters.  Linear weights are stored pre-transposed
    # as (in_features, out_features) so the kernel does x @ W directly;
    # gating_weight is used un-transposed in the module, so it is stored as-is.
    params = {
        'gating_w':  jax.random.normal(ks[0], (H, H), jnp.float32) * s,
        'gating_b':  jax.random.normal(ks[1], (1, H), jnp.float32) * 0.1,
        'metric_w1': jax.random.normal(ks[2], (1, H), jnp.float32),
        'metric_w2': jax.random.normal(ks[3], (1, H), jnp.float32),
        'wq':        jax.random.normal(ks[4], (H, H), jnp.float32) * s,
        'bq':        jax.random.normal(ks[5], (1, H), jnp.float32) * 0.1,
        'wk':        jax.random.normal(ks[6], (H, H), jnp.float32) * s,
        'bk':        jax.random.normal(ks[7], (1, H), jnp.float32) * 0.1,
        'wv':        jax.random.normal(ks[8], (H, H), jnp.float32) * s,
        'bv':        jax.random.normal(ks[9], (1, H), jnp.float32) * 0.1,
        'w_gate':    jax.random.normal(ks[10], (H, H), jnp.float32) * s,
        'b_gate':    jax.random.normal(ks[11], (1, H), jnp.float32) * 0.1,
        'w_dense':   jax.random.normal(ks[12], (H, H), jnp.float32) * s,
        'b_dense':   jax.random.normal(ks[13], (1, H), jnp.float32) * 0.1,
        'ln_g':      1.0 + 0.1 * jax.random.normal(ks[14], (1, H), jnp.float32),
        'ln_b':      0.1 * jax.random.normal(ks[15], (1, H), jnp.float32),
        'weights':   jnp.array([0.5, 0.5], jnp.float32),   # as in the module init
    }

    x = jax.random.normal(ks[16], (B, L, H), jnp.float32)

    out = multi_head_attention(x, params, n_heads=n_heads, layer_norm_eps=layer_norm_eps)
    out = jax.block_until_ready(out)

    ref = multi_head_attention_ref(x, params, n_heads=n_heads, layer_norm_eps=layer_norm_eps)

    assert out.shape == (B, L, H)
    # Tolerance covers the approx EUP reciprocals (softmax denom + sigmoid/SiLU paths).
    assert bool(jnp.allclose(out, ref, atol=5e-3, rtol=5e-3)), \
        "Pallas kernel does not match pure-JAX reference"

    print("KERNEL_OK")
</pallas_src>

<mosaic_0001>
module attributes {stable_mosaic.version = 11 : i64} {
  func.func @mha_kernel(%arg0: i32, %arg1: memref<1x8x128xf32, #tpu.memory_space<vmem>>, %arg2: memref<128x128xf32, #tpu.memory_space<vmem>>, %arg3: memref<1x128xf32, #tpu.memory_space<vmem>>, %arg4: memref<1x128xf32, #tpu.memory_space<vmem>>, %arg5: memref<1x128xf32, #tpu.memory_space<vmem>>, %arg6: memref<128x128xf32, #tpu.memory_space<vmem>>, %arg7: memref<1x128xf32, #tpu.memory_space<vmem>>, %arg8: memref<128x128xf32, #tpu.memory_space<vmem>>, %arg9: memref<1x128xf32, #tpu.memory_space<vmem>>, %arg10: memref<128x128xf32, #tpu.memory_space<vmem>>, %arg11: memref<1x128xf32, #tpu.memory_space<vmem>>, %arg12: memref<128x128xf32, #tpu.memory_space<vmem>>, %arg13: memref<1x128xf32, #tpu.memory_space<vmem>>, %arg14: memref<128x128xf32, #tpu.memory_space<vmem>>, %arg15: memref<1x128xf32, #tpu.memory_space<vmem>>, %arg16: memref<1x128xf32, #tpu.memory_space<vmem>>, %arg17: memref<1x128xf32, #tpu.memory_space<vmem>>, %arg18: memref<1xf32, #tpu.memory_space<smem>>, %arg19: memref<1x8x128xf32, #tpu.memory_space<vmem>>) attributes {dimension_semantics = [#tpu.dimension_semantics<parallel>], iteration_bounds = array<i64: 2>, scalar_prefetch = 0 : i64, scratch_operands = 0 : i64, tpu.core_type = #tpu.core_type<tc>, window_params = [{transform_indices = @transform_0, window_bounds = array<i64: 1, 8, 128>}, {pipeline_mode = #tpu.pipeline_mode<synchronous>, transform_indices = @transform_1, window_bounds = array<i64: 128, 128>}, {pipeline_mode = #tpu.pipeline_mode<synchronous>, transform_indices = @transform_2, window_bounds = array<i64: 1, 128>}, {pipeline_mode = #tpu.pipeline_mode<synchronous>, transform_indices = @transform_3, window_bounds = array<i64: 1, 128>}, {pipeline_mode = #tpu.pipeline_mode<synchronous>, transform_indices = @transform_4, window_bounds = array<i64: 1, 128>}, {pipeline_mode = #tpu.pipeline_mode<synchronous>, transform_indices = @transform_5, window_bounds = array<i64: 128, 128>}, {pipeline_mode = #tpu.pipeline_mode<synchronous>, transform_indices = @transform_6, window_bounds = array<i64: 1, 128>}, {pipeline_mode = #tpu.pipeline_mode<synchronous>, transform_indices = @transform_7, window_bounds = array<i64: 128, 128>}, {pipeline_mode = #tpu.pipeline_mode<synchronous>, transform_indices = @transform_8, window_bounds = array<i64: 1, 128>}, {pipeline_mode = #tpu.pipeline_mode<synchronous>, transform_indices = @transform_9, window_bounds = array<i64: 128, 128>}, {pipeline_mode = #tpu.pipeline_mode<synchronous>, transform_indices = @transform_10, window_bounds = array<i64: 1, 128>}, {pipeline_mode = #tpu.pipeline_mode<synchronous>, transform_indices = @transform_11, window_bounds = array<i64: 128, 128>}, {pipeline_mode = #tpu.pipeline_mode<synchronous>, transform_indices = @transform_12, window_bounds = array<i64: 1, 128>}, {pipeline_mode = #tpu.pipeline_mode<synchronous>, transform_indices = @transform_13, window_bounds = array<i64: 128, 128>}, {pipeline_mode = #tpu.pipeline_mode<synchronous>, transform_indices = @transform_14, window_bounds = array<i64: 1, 128>}, {pipeline_mode = #tpu.pipeline_mode<synchronous>, transform_indices = @transform_15, window_bounds = array<i64: 1, 128>}, {pipeline_mode = #tpu.pipeline_mode<synchronous>, transform_indices = @transform_16, window_bounds = array<i64: 1, 128>}, {transform_indices = @transform_17, window_bounds = array<i64: 1>}, {transform_indices = @transform_18, window_bounds = array<i64: 1, 8, 128>}]} {
    %c0 = arith.constant 0 : index
    %c0_0 = arith.constant 0 : index
    %c0_1 = arith.constant 0 : index
    %0 = vector.load %arg1[%c0, %c0_0, %c0_1] : memref<1x8x128xf32, #tpu.memory_space<vmem>>, vector<1x8x128xf32>
    %1 = vector.shape_cast %0 : vector<1x8x128xf32> to vector<8x128xf32>
    %c0_2 = arith.constant 0 : index
    %c0_3 = arith.constant 0 : index
    %2 = vector.load %arg2[%c0_2, %c0_3] : memref<128x128xf32, #tpu.memory_space<vmem>>, vector<128x128xf32>
    %cst = arith.constant dense<0.000000e+00> : vector<8x128xf32>
    %3 = tpu.matmul %1, %2, %cst {dimension_numbers = #tpu.dot_dimension_numbers<[1], [0], [0], [1], [0, 0, 1, 1], [], []>} : vector<8x128xf32>, vector<128x128xf32>, vector<8x128xf32> -> vector<8x128xf32>
    %c0_4 = arith.constant 0 : index
    %c0_5 = arith.constant 0 : index
    %4 = vector.load %arg3[%c0_4, %c0_5] : memref<1x128xf32, #tpu.memory_space<vmem>>, vector<1x128xf32>
    %5 = vector.broadcast %4 : vector<1x128xf32> to vector<8x128xf32>
    %6 = arith.addf %3, %5 : vector<8x128xf32>
    %cst_6 = arith.constant 0.000000e+00 : f32
    %7 = vector.broadcast %cst_6 : f32 to vector<8x128xf32>
    %8 = arith.subf %7, %6 : vector<8x128xf32>
    %9 = math.exp %8 : vector<8x128xf32>
    %cst_7 = arith.constant 1.000000e+00 : f32
    %10 = vector.broadcast %cst_7 : f32 to vector<8x128xf32>
    %11 = arith.addf %10, %9 : vector<8x128xf32>
    %12 = tpu.reciprocal %11 {approx = true} : vector<8x128xf32> -> vector<8x128xf32>
    %13 = arith.mulf %1, %12 : vector<8x128xf32>
    %c0_8 = arith.constant 0 : index
    %c0_9 = arith.constant 0 : index
    %14 = vector.load %arg4[%c0_8, %c0_9] : memref<1x128xf32, #tpu.memory_space<vmem>>, vector<1x128xf32>
    %c0_10 = arith.constant 0 : index
    %c0_11 = arith.constant 0 : index
    %15 = vector.load %arg5[%c0_10, %c0_11] : memref<1x128xf32, #tpu.memory_space<vmem>>, vector<1x128xf32>
    %16 = arith.addf %14, %15 : vector<1x128xf32>
    %cst_12 = arith.constant 5.000000e-01 : f32
    %17 = vector.broadcast %cst_12 : f32 to vector<1x128xf32>
    %18 = arith.mulf %17, %16 : vector<1x128xf32>
    %19 = vector.broadcast %18 : vector<1x128xf32> to vector<8x128xf32>
    %20 = arith.mulf %13, %19 : vector<8x128xf32>
    %21 = arith.mulf %20, %20 : vector<8x128xf32>
    %cst_13 = arith.constant dense<0.000000e+00> : vector<128xf32>
    %22 = vector.multi_reduction <add>, %21, %cst_13 [0] : vector<8x128xf32> to vector<128xf32>
    %23 = vector.shape_cast %22 : vector<128xf32> to vector<1x128xf32>
    %cst_14 = arith.constant 1.000000e-24 : f32
    %24 = vector.broadcast %cst_14 : f32 to vector<1x128xf32>
    %25 = arith.maximumf %23, %24 : vector<1x128xf32>
    %26 = math.rsqrt %25 : vector<1x128xf32>
    %27 = vector.broadcast %26 : vector<1x128xf32> to vector<8x128xf32>
    %28 = arith.mulf %20, %27 : vector<8x128xf32>
    "tpu.trace_start"() <{level = 10 : i32, message = "lh,mh->lm"}> : () -> ()
    %cst_15 = arith.constant dense<0.000000e+00> : vector<8x8xf32>
    %29 = tpu.matmul %28, %28, %cst_15 {dimension_numbers = #tpu.dot_dimension_numbers<[1], [1], [0], [0], [0, 0, 1, 0], [], []>} : vector<8x128xf32>, vector<8x128xf32>, vector<8x8xf32> -> vector<8x8xf32>
    %cst_16 = arith.constant 0.000000e+00 : f32
    "tpu.trace_stop"() : () -> ()
    %30 = vector.broadcast %cst_16 : f32 to vector<8x8xf32>
    %31 = arith.cmpf olt, %29, %30 : vector<8x8xf32>
    %cst_17 = arith.constant 0.00999999977 : f32
    %32 = vector.broadcast %cst_17 : f32 to vector<8x8xf32>
    %33 = arith.select %31, %32, %29 : vector<8x8xi1>, vector<8x8xf32>
    %c0_18 = arith.constant 0 : index
    %34 = memref.load %arg18[%c0_18] : memref<1xf32, #tpu.memory_space<smem>>
    %35 = vector.broadcast %34 : f32 to vector<8x8xf32>
    %36 = arith.mulf %35, %33 : vector<8x8xf32>
    %c0_19 = arith.constant 0 : index
    %c0_20 = arith.constant 0 : index
    %37 = vector.load %arg6[%c0_19, %c0_20] : memref<128x128xf32, #tpu.memory_space<vmem>>, vector<128x128xf32>
    %cst_21 = arith.constant dense<0.000000e+00> : vector<8x128xf32>
    %38 = tpu.matmul %1, %37, %cst_21 {dimension_numbers = #tpu.dot_dimension_numbers<[1], [0], [0], [1], [0, 0, 1, 1], [], []>} : vector<8x128xf32>, vector<128x128xf32>, vector<8x128xf32> -> vector<8x128xf32>
    %c0_22 = arith.constant 0 : index
    %c0_23 = arith.constant 0 : index
    %39 = vector.load %arg7[%c0_22, %c0_23] : memref<1x128xf32, #tpu.memory_space<vmem>>, vector<1x128xf32>
    %40 = vector.broadcast %39 : vector<1x128xf32> to vector<8x128xf32>
    %41 = arith.addf %38, %40 : vector<8x128xf32>
    %c0_24 = arith.constant 0 : index
    %c0_25 = arith.constant 0 : index
    %42 = vector.load %arg8[%c0_24, %c0_25] : memref<128x128xf32, #tpu.memory_space<vmem>>, vector<128x128xf32>
    %cst_26 = arith.constant dense<0.000000e+00> : vector<8x128xf32>
    %43 = tpu.matmul %1, %42, %cst_26 {dimension_numbers = #tpu.dot_dimension_numbers<[1], [0], [0], [1], [0, 0, 1, 1], [], []>} : vector<8x128xf32>, vector<128x128xf32>, vector<8x128xf32> -> vector<8x128xf32>
    %c0_27 = arith.constant 0 : index
    %c0_28 = arith.constant 0 : index
    %44 = vector.load %arg9[%c0_27, %c0_28] : memref<1x128xf32, #tpu.memory_space<vmem>>, vector<1x128xf32>
    %45 = vector.broadcast %44 : vector<1x128xf32> to vector<8x128xf32>
    %46 = arith.addf %43, %45 : vector<8x128xf32>
    %c0_29 = arith.constant 0 : index
    %c0_30 = arith.constant 0 : index
    %47 = vector.load %arg10[%c0_29, %c0_30] : memref<128x128xf32, #tpu.memory_space<vmem>>, vector<128x128xf32>
    %cst_31 = arith.constant dense<0.000000e+00> : vector<8x128xf32>
    %48 = tpu.matmul %1, %47, %cst_31 {dimension_numbers = #tpu.dot_dimension_numbers<[1], [0], [0], [1], [0, 0, 1, 1], [], []>} : vector<8x128xf32>, vector<128x128xf32>, vector<8x128xf32> -> vector<8x128xf32>
    %c0_32 = arith.constant 0 : index
    %c0_33 = arith.constant 0 : index
    %49 = vector.load %arg11[%c0_32, %c0_33] : memref<1x128xf32, #tpu.memory_space<vmem>>, vector<1x128xf32>
    %50 = vector.broadcast %49 : vector<1x128xf32> to vector<8x128xf32>
    %51 = arith.addf %48, %50 : vector<8x128xf32>
    %52 = tpu.iota {dimensions = array<i32: 1>} : vector<8x128xi32>
    %c0_i32 = arith.constant 0 : i32
    %53 = vector.broadcast %c0_i32 : i32 to vector<8x128xi32>
    %54 = arith.cmpi sge, %52, %53 : vector<8x128xi32>
    %c32_i32 = arith.constant 32 : i32
    %55 = vector.broadcast %c32_i32 : i32 to vector<8x128xi32>
    %56 = arith.cmpi slt, %52, %55 : vector<8x128xi32>
    %57 = arith.andi %54, %56 : vector<8x128xi1>
    %cst_34 = arith.constant 0.000000e+00 : f32
    %58 = vector.broadcast %cst_34 : f32 to vector<8x128xf32>
    %59 = arith.select %57, %46, %58 : vector<8x128xi1>, vector<8x128xf32>
    %cst_35 = arith.constant 0.000000e+00 : f32
    %60 = vector.broadcast %cst_35 : f32 to vector<8x128xf32>
    %61 = arith.select %57, %51, %60 : vector<8x128xi1>, vector<8x128xf32>
    "tpu.trace_start"() <{level = 10 : i32, message = "lh,mh->lm"}> : () -> ()
    %cst_36 = arith.constant dense<0.000000e+00> : vector<8x8xf32>
    %62 = tpu.matmul %41, %59, %cst_36 {dimension_numbers = #tpu.dot_dimension_numbers<[1], [1], [0], [0], [0, 0, 1, 0], [], []>} : vector<8x128xf32>, vector<8x128xf32>, vector<8x8xf32> -> vector<8x8xf32>
    "tpu.trace_stop"() : () -> ()
    %63 = arith.addf %62, %36 : vector<8x8xf32>
    %cst_37 = arith.constant dense<0xFF800000> : vector<8xf32>
    %64 = vector.multi_reduction <maximumf>, %63, %cst_37 [1] : vector<8x8xf32> to vector<8xf32>
    %65 = vector.shape_cast %64 : vector<8xf32> to vector<8x1xf32>
    %66 = vector.broadcast %65 : vector<8x1xf32> to vector<8x8xf32>
    %67 = arith.subf %63, %66 : vector<8x8xf32>
    %68 = math.exp %67 : vector<8x8xf32>
    %cst_38 = arith.constant dense<0.000000e+00> : vector<8xf32>
    %69 = vector.multi_reduction <add>, %68, %cst_38 [1] : vector<8x8xf32> to vector<8xf32>
    %70 = vector.shape_cast %69 : vector<8xf32> to vector<8x1xf32>
    %71 = tpu.reciprocal %70 {approx = true} : vector<8x1xf32> -> vector<8x1xf32>
    %72 = vector.broadcast %71 : vector<8x1xf32> to vector<8x8xf32>
    %73 = arith.mulf %68, %72 : vector<8x8xf32>
    %cst_39 = arith.constant dense<0.000000e+00> : vector<8x128xf32>
    %74 = tpu.matmul %73, %61, %cst_39 {dimension_numbers = #tpu.dot_dimension_numbers<[1], [0], [0], [1], [0, 0, 1, 1], [], []>} : vector<8x8xf32>, vector<8x128xf32>, vector<8x128xf32> -> vector<8x128xf32>
    %c32_i32_40 = arith.constant 32 : i32
    %75 = vector.broadcast %c32_i32_40 : i32 to vector<8x128xi32>
    %76 = arith.cmpi sge, %52, %75 : vector<8x128xi32>
    %c64_i32 = arith.constant 64 : i32
    %77 = vector.broadcast %c64_i32 : i32 to vector<8x128xi32>
    %78 = arith.cmpi slt, %52, %77 : vector<8x128xi32>
    %79 = arith.andi %76, %78 : vector<8x128xi1>
    %cst_41 = arith.constant 0.000000e+00 : f32
    %80 = vector.broadcast %cst_41 : f32 to vector<8x128xf32>
    %81 = arith.select %79, %46, %80 : vector<8x128xi1>, vector<8x128xf32>
    %cst_42 = arith.constant 0.000000e+00 : f32
    %82 = vector.broadcast %cst_42 : f32 to vector<8x128xf32>
    %83 = arith.select %79, %51, %82 : vector<8x128xi1>, vector<8x128xf32>
    "tpu.trace_start"() <{level = 10 : i32, message = "lh,mh->lm"}> : () -> ()
    %cst_43 = arith.constant dense<0.000000e+00> : vector<8x8xf32>
    %84 = tpu.matmul %41, %81, %cst_43 {dimension_numbers = #tpu.dot_dimension_numbers<[1], [1], [0], [0], [0, 0, 1, 0], [], []>} : vector<8x128xf32>, vector<8x128xf32>, vector<8x8xf32> -> vector<8x8xf32>
    "tpu.trace_stop"() : () -> ()
    %85 = arith.addf %84, %36 : vector<8x8xf32>
    %cst_44 = arith.constant dense<0xFF800000> : vector<8xf32>
    %86 = vector.multi_reduction <maximumf>, %85, %cst_44 [1] : vector<8x8xf32> to vector<8xf32>
    %87 = vector.shape_cast %86 : vector<8xf32> to vector<8x1xf32>
    %88 = vector.broadcast %87 : vector<8x1xf32> to vector<8x8xf32>
    %89 = arith.subf %85, %88 : vector<8x8xf32>
    %90 = math.exp %89 : vector<8x8xf32>
    %cst_45 = arith.constant dense<0.000000e+00> : vector<8xf32>
    %91 = vector.multi_reduction <add>, %90, %cst_45 [1] : vector<8x8xf32> to vector<8xf32>
    %92 = vector.shape_cast %91 : vector<8xf32> to vector<8x1xf32>
    %93 = tpu.reciprocal %92 {approx = true} : vector<8x1xf32> -> vector<8x1xf32>
    %94 = vector.broadcast %93 : vector<8x1xf32> to vector<8x8xf32>
    %95 = arith.mulf %90, %94 : vector<8x8xf32>
    %cst_46 = arith.constant dense<0.000000e+00> : vector<8x128xf32>
    %96 = tpu.matmul %95, %83, %cst_46 {dimension_numbers = #tpu.dot_dimension_numbers<[1], [0], [0], [1], [0, 0, 1, 1], [], []>} : vector<8x8xf32>, vector<8x128xf32>, vector<8x128xf32> -> vector<8x128xf32>
    %97 = arith.addf %74, %96 : vector<8x128xf32>
    %c64_i32_47 = arith.constant 64 : i32
    %98 = vector.broadcast %c64_i32_47 : i32 to vector<8x128xi32>
    %99 = arith.cmpi sge, %52, %98 : vector<8x128xi32>
    %c96_i32 = arith.constant 96 : i32
    %100 = vector.broadcast %c96_i32 : i32 to vector<8x128xi32>
    %101 = arith.cmpi slt, %52, %100 : vector<8x128xi32>
    %102 = arith.andi %99, %101 : vector<8x128xi1>
    %cst_48 = arith.constant 0.000000e+00 : f32
    %103 = vector.broadcast %cst_48 : f32 to vector<8x128xf32>
    %104 = arith.select %102, %46, %103 : vector<8x128xi1>, vector<8x128xf32>
    %cst_49 = arith.constant 0.000000e+00 : f32
    %105 = vector.broadcast %cst_49 : f32 to vector<8x128xf32>
    %106 = arith.select %102, %51, %105 : vector<8x128xi1>, vector<8x128xf32>
    "tpu.trace_start"() <{level = 10 : i32, message = "lh,mh->lm"}> : () -> ()
    %cst_50 = arith.constant dense<0.000000e+00> : vector<8x8xf32>
    %107 = tpu.matmul %41, %104, %cst_50 {dimension_numbers = #tpu.dot_dimension_numbers<[1], [1], [0], [0], [0, 0, 1, 0], [], []>} : vector<8x128xf32>, vector<8x128xf32>, vector<8x8xf32> -> vector<8x8xf32>
    "tpu.trace_stop"() : () -> ()
    %108 = arith.addf %107, %36 : vector<8x8xf32>
    %cst_51 = arith.constant dense<0xFF800000> : vector<8xf32>
    %109 = vector.multi_reduction <maximumf>, %108, %cst_51 [1] : vector<8x8xf32> to vector<8xf32>
    %110 = vector.shape_cast %109 : vector<8xf32> to vector<8x1xf32>
    %111 = vector.broadcast %110 : vector<8x1xf32> to vector<8x8xf32>
    %112 = arith.subf %108, %111 : vector<8x8xf32>
    %113 = math.exp %112 : vector<8x8xf32>
    %cst_52 = arith.constant dense<0.000000e+00> : vector<8xf32>
    %114 = vector.multi_reduction <add>, %113, %cst_52 [1] : vector<8x8xf32> to vector<8xf32>
    %115 = vector.shape_cast %114 : vector<8xf32> to vector<8x1xf32>
    %116 = tpu.reciprocal %115 {approx = true} : vector<8x1xf32> -> vector<8x1xf32>
    %117 = vector.broadcast %116 : vector<8x1xf32> to vector<8x8xf32>
    %118 = arith.mulf %113, %117 : vector<8x8xf32>
    %cst_53 = arith.constant dense<0.000000e+00> : vector<8x128xf32>
    %119 = tpu.matmul %118, %106, %cst_53 {dimension_numbers = #tpu.dot_dimension_numbers<[1], [0], [0], [1], [0, 0, 1, 1], [], []>} : vector<8x8xf32>, vector<8x128xf32>, vector<8x128xf32> -> vector<8x128xf32>
    %120 = arith.addf %97, %119 : vector<8x128xf32>
    %c96_i32_54 = arith.constant 96 : i32
    %121 = vector.broadcast %c96_i32_54 : i32 to vector<8x128xi32>
    %122 = arith.cmpi sge, %52, %121 : vector<8x128xi32>
    %c128_i32 = arith.constant 128 : i32
    %123 = vector.broadcast %c128_i32 : i32 to vector<8x128xi32>
    %124 = arith.cmpi slt, %52, %123 : vector<8x128xi32>
    %125 = arith.andi %122, %124 : vector<8x128xi1>
    %cst_55 = arith.constant 0.000000e+00 : f32
    %126 = vector.broadcast %cst_55 : f32 to vector<8x128xf32>
    %127 = arith.select %125, %46, %126 : vector<8x128xi1>, vector<8x128xf32>
    %cst_56 = arith.constant 0.000000e+00 : f32
    %128 = vector.broadcast %cst_56 : f32 to vector<8x128xf32>
    %129 = arith.select %125, %51, %128 : vector<8x128xi1>, vector<8x128xf32>
    "tpu.trace_start"() <{level = 10 : i32, message = "lh,mh->lm"}> : () -> ()
    %cst_57 = arith.constant dense<0.000000e+00> : vector<8x8xf32>
    %130 = tpu.matmul %41, %127, %cst_57 {dimension_numbers = #tpu.dot_dimension_numbers<[1], [1], [0], [0], [0, 0, 1, 0], [], []>} : vector<8x128xf32>, vector<8x128xf32>, vector<8x8xf32> -> vector<8x8xf32>
    "tpu.trace_stop"() : () -> ()
    %131 = arith.addf %130, %36 : vector<8x8xf32>
    %cst_58 = arith.constant dense<0xFF800000> : vector<8xf32>
    %132 = vector.multi_reduction <maximumf>, %131, %cst_58 [1] : vector<8x8xf32> to vector<8xf32>
    %133 = vector.shape_cast %132 : vector<8xf32> to vector<8x1xf32>
    %134 = vector.broadcast %133 : vector<8x1xf32> to vector<8x8xf32>
    %135 = arith.subf %131, %134 : vector<8x8xf32>
    %136 = math.exp %135 : vector<8x8xf32>
    %cst_59 = arith.constant dense<0.000000e+00> : vector<8xf32>
    %137 = vector.multi_reduction <add>, %136, %cst_59 [1] : vector<8x8xf32> to vector<8xf32>
    %138 = vector.shape_cast %137 : vector<8xf32> to vector<8x1xf32>
    %139 = tpu.reciprocal %138 {approx = true} : vector<8x1xf32> -> vector<8x1xf32>
    %140 = vector.broadcast %139 : vector<8x1xf32> to vector<8x8xf32>
    %141 = arith.mulf %136, %140 : vector<8x8xf32>
    %cst_60 = arith.constant dense<0.000000e+00> : vector<8x128xf32>
    %142 = tpu.matmul %141, %129, %cst_60 {dimension_numbers = #tpu.dot_dimension_numbers<[1], [0], [0], [1], [0, 0, 1, 1], [], []>} : vector<8x8xf32>, vector<8x128xf32>, vector<8x128xf32> -> vector<8x128xf32>
    %143 = arith.addf %120, %142 : vector<8x128xf32>
    %c0_61 = arith.constant 0 : index
    %c0_62 = arith.constant 0 : index
    %144 = vector.load %arg12[%c0_61, %c0_62] : memref<128x128xf32, #tpu.memory_space<vmem>>, vector<128x128xf32>
    %cst_63 = arith.constant dense<0.000000e+00> : vector<8x128xf32>
    %145 = tpu.matmul %143, %144, %cst_63 {dimension_numbers = #tpu.dot_dimension_numbers<[1], [0], [0], [1], [0, 0, 1, 1], [], []>} : vector<8x128xf32>, vector<128x128xf32>, vector<8x128xf32> -> vector<8x128xf32>
    %c0_64 = arith.constant 0 : index
    %c0_65 = arith.constant 0 : index
    %146 = vector.load %arg13[%c0_64, %c0_65] : memref<1x128xf32, #tpu.memory_space<vmem>>, vector<1x128xf32>
    %147 = vector.broadcast %146 : vector<1x128xf32> to vector<8x128xf32>
    %148 = arith.addf %145, %147 : vector<8x128xf32>
    %cst_66 = arith.constant 0.000000e+00 : f32
    %149 = vector.broadcast %cst_66 : f32 to vector<8x128xf32>
    %150 = arith.subf %149, %148 : vector<8x128xf32>
    %151 = math.exp %150 : vector<8x128xf32>
    %cst_67 = arith.constant 1.000000e+00 : f32
    %152 = vector.broadcast %cst_67 : f32 to vector<8x128xf32>
    %153 = arith.addf %152, %151 : vector<8x128xf32>
    %154 = tpu.reciprocal %153 {approx = true} : vector<8x128xf32> -> vector<8x128xf32>
    %155 = arith.mulf %148, %154 : vector<8x128xf32>
    %156 = arith.mulf %143, %155 : vector<8x128xf32>
    %c0_68 = arith.constant 0 : index
    %c0_69 = arith.constant 0 : index
    %157 = vector.load %arg14[%c0_68, %c0_69] : memref<128x128xf32, #tpu.memory_space<vmem>>, vector<128x128xf32>
    %cst_70 = arith.constant dense<0.000000e+00> : vector<8x128xf32>
    %158 = tpu.matmul %156, %157, %cst_70 {dimension_numbers = #tpu.dot_dimension_numbers<[1], [0], [0], [1], [0, 0, 1, 1], [], []>} : vector<8x128xf32>, vector<128x128xf32>, vector<8x128xf32> -> vector<8x128xf32>
    %c0_71 = arith.constant 0 : index
    %c0_72 = arith.constant 0 : index
    %159 = vector.load %arg15[%c0_71, %c0_72] : memref<1x128xf32, #tpu.memory_space<vmem>>, vector<1x128xf32>
    %160 = vector.broadcast %159 : vector<1x128xf32> to vector<8x128xf32>
    %161 = arith.addf %158, %160 : vector<8x128xf32>
    %162 = arith.addf %161, %1 : vector<8x128xf32>
    %cst_73 = arith.constant dense<0.000000e+00> : vector<8xf32>
    %163 = vector.multi_reduction <add>, %162, %cst_73 [1] : vector<8x128xf32> to vector<8xf32>
    %164 = vector.shape_cast %163 : vector<8xf32> to vector<8x1xf32>
    %cst_74 = arith.constant 1.280000e+02 : f32
    %165 = vector.broadcast %cst_74 : f32 to vector<8x1xf32>
    %166 = arith.divf %164, %165 : vector<8x1xf32>
    %167 = vector.broadcast %166 : vector<8x1xf32> to vector<8x128xf32>
    %168 = arith.subf %162, %167 : vector<8x128xf32>
    %169 = arith.mulf %168, %168 : vector<8x128xf32>
    %cst_75 = arith.constant dense<0.000000e+00> : vector<8xf32>
    %170 = vector.multi_reduction <add>, %169, %cst_75 [1] : vector<8x128xf32> to vector<8xf32>
    %171 = vector.shape_cast %170 : vector<8xf32> to vector<8x1xf32>
    %cst_76 = arith.constant 1.280000e+02 : f32
    %172 = vector.broadcast %cst_76 : f32 to vector<8x1xf32>
    %173 = arith.divf %171, %172 : vector<8x1xf32>
    %174 = vector.broadcast %166 : vector<8x1xf32> to vector<8x128xf32>
    %175 = arith.subf %162, %174 : vector<8x128xf32>
    %cst_77 = arith.constant 9.99999996E-13 : f32
    %176 = vector.broadcast %cst_77 : f32 to vector<8x1xf32>
    %177 = arith.addf %173, %176 : vector<8x1xf32>
    %178 = math.rsqrt %177 : vector<8x1xf32>
    %179 = vector.broadcast %178 : vector<8x1xf32> to vector<8x128xf32>
    %180 = arith.mulf %175, %179 : vector<8x128xf32>
    %c0_78 = arith.constant 0 : index
    %c0_79 = arith.constant 0 : index
    %181 = vector.load %arg16[%c0_78, %c0_79] : memref<1x128xf32, #tpu.memory_space<vmem>>, vector<1x128xf32>
    %182 = vector.broadcast %181 : vector<1x128xf32> to vector<8x128xf32>
    %183 = arith.mulf %180, %182 : vector<8x128xf32>
    %c0_80 = arith.constant 0 : index
    %c0_81 = arith.constant 0 : index
    %184 = vector.load %arg17[%c0_80, %c0_81] : memref<1x128xf32, #tpu.memory_space<vmem>>, vector<1x128xf32>
    %185 = vector.broadcast %184 : vector<1x128xf32> to vector<8x128xf32>
    %186 = arith.addf %183, %185 : vector<8x128xf32>
    %c0_82 = arith.constant 0 : index
    %c0_83 = arith.constant 0 : index
    %c0_84 = arith.constant 0 : index
    %187 = vector.load %arg19[%c0_82, %c0_83, %c0_84] : memref<1x8x128xf32, #tpu.memory_space<vmem>>, vector<1x8x128xf32>
    %188 = vector.shape_cast %187 : vector<1x8x128xf32> to vector<8x128xf32>
    %189 = vector.shape_cast %186 : vector<8x128xf32> to vector<1x8x128xf32>
    tpu.vector_store %arg19[%c0_82, %c0_83, %c0_84], %189 {strides = array<i32>} : memref<1x8x128xf32, #tpu.memory_space<vmem>>, vector<1x8x128xf32>,
    return
  }
  func.func @transform_0(%arg0: i32) -> (i32, i32, i32) {
    %c0_i32 = arith.constant 0 : i32
    %c0_i32_0 = arith.constant 0 : i32
    %c0_i32_1 = arith.constant 0 : i32
    return %arg0, %c0_i32, %c0_i32_0 : i32, i32, i32
  }
  func.func @transform_1(%arg0: i32) -> (i32, i32) {
    %c0_i32 = arith.constant 0 : i32
    %c0_i32_0 = arith.constant 0 : i32
    %c0_i32_1 = arith.constant 0 : i32
    return %c0_i32, %c0_i32_0 : i32, i32
  }
  func.func @transform_2(%arg0: i32) -> (i32, i32) {
    %c0_i32 = arith.constant 0 : i32
    %c0_i32_0 = arith.constant 0 : i32
    %c0_i32_1 = arith.constant 0 : i32
    return %c0_i32, %c0_i32_0 : i32, i32
  }
  func.func @transform_3(%arg0: i32) -> (i32, i32) {
    %c0_i32 = arith.constant 0 : i32
    %c0_i32_0 = arith.constant 0 : i32
    %c0_i32_1 = arith.constant 0 : i32
    return %c0_i32, %c0_i32_0 : i32, i32
  }
  func.func @transform_4(%arg0: i32) -> (i32, i32) {
    %c0_i32 = arith.constant 0 : i32
    %c0_i32_0 = arith.constant 0 : i32
    %c0_i32_1 = arith.constant 0 : i32
    return %c0_i32, %c0_i32_0 : i32, i32
  }
  func.func @transform_5(%arg0: i32) -> (i32, i32) {
    %c0_i32 = arith.constant 0 : i32
    %c0_i32_0 = arith.constant 0 : i32
    %c0_i32_1 = arith.constant 0 : i32
    return %c0_i32, %c0_i32_0 : i32, i32
  }
  func.func @transform_6(%arg0: i32) -> (i32, i32) {
    %c0_i32 = arith.constant 0 : i32
    %c0_i32_0 = arith.constant 0 : i32
    %c0_i32_1 = arith.constant 0 : i32
    return %c0_i32, %c0_i32_0 : i32, i32
  }
  func.func @transform_7(%arg0: i32) -> (i32, i32) {
    %c0_i32 = arith.constant 0 : i32
    %c0_i32_0 = arith.constant 0 : i32
    %c0_i32_1 = arith.constant 0 : i32
    return %c0_i32, %c0_i32_0 : i32, i32
  }
  func.func @transform_8(%arg0: i32) -> (i32, i32) {
    %c0_i32 = arith.constant 0 : i32
    %c0_i32_0 = arith.constant 0 : i32
    %c0_i32_1 = arith.constant 0 : i32
    return %c0_i32, %c0_i32_0 : i32, i32
  }
  func.func @transform_9(%arg0: i32) -> (i32, i32) {
    %c0_i32 = arith.constant 0 : i32
    %c0_i32_0 = arith.constant 0 : i32
    %c0_i32_1 = arith.constant 0 : i32
    return %c0_i32, %c0_i32_0 : i32, i32
  }
  func.func @transform_10(%arg0: i32) -> (i32, i32) {
    %c0_i32 = arith.constant 0 : i32
    %c0_i32_0 = arith.constant 0 : i32
    %c0_i32_1 = arith.constant 0 : i32
    return %c0_i32, %c0_i32_0 : i32, i32
  }
  func.func @transform_11(%arg0: i32) -> (i32, i32) {
    %c0_i32 = arith.constant 0 : i32
    %c0_i32_0 = arith.constant 0 : i32
    %c0_i32_1 = arith.constant 0 : i32
    return %c0_i32, %c0_i32_0 : i32, i32
  }
  func.func @transform_12(%arg0: i32) -> (i32, i32) {
    %c0_i32 = arith.constant 0 : i32
    %c0_i32_0 = arith.constant 0 : i32
    %c0_i32_1 = arith.constant 0 : i32
    return %c0_i32, %c0_i32_0 : i32, i32
  }
  func.func @transform_13(%arg0: i32) -> (i32, i32) {
    %c0_i32 = arith.constant 0 : i32
    %c0_i32_0 = arith.constant 0 : i32
    %c0_i32_1 = arith.constant 0 : i32
    return %c0_i32, %c0_i32_0 : i32, i32
  }
  func.func @transform_14(%arg0: i32) -> (i32, i32) {
    %c0_i32 = arith.constant 0 : i32
    %c0_i32_0 = arith.constant 0 : i32
    %c0_i32_1 = arith.constant 0 : i32
    return %c0_i32, %c0_i32_0 : i32, i32
  }
  func.func @transform_15(%arg0: i32) -> (i32, i32) {
    %c0_i32 = arith.constant 0 : i32
    %c0_i32_0 = arith.constant 0 : i32
    %c0_i32_1 = arith.constant 0 : i32
    return %c0_i32, %c0_i32_0 : i32, i32
  }
  func.func @transform_16(%arg0: i32) -> (i32, i32) {
    %c0_i32 = arith.constant 0 : i32
    %c0_i32_0 = arith.constant 0 : i32
    %c0_i32_1 = arith.constant 0 : i32
    return %c0_i32, %c0_i32_0 : i32, i32
  }
  func.func @transform_17(%arg0: i32) -> i32 {
    %c0_i32 = arith.constant 0 : i32
    %c0_i32_0 = arith.constant 0 : i32
    return %c0_i32 : i32
  }
  func.func @transform_18(%arg0: i32) -> (i32, i32, i32) {
    %c0_i32 = arith.constant 0 : i32
    %c0_i32_0 = arith.constant 0 : i32
    %c0_i32_1 = arith.constant 0 : i32
    return %arg0, %c0_i32, %c0_i32_0 : i32, i32, i32
  }
}

</mosaic_0001>

<llo_original>
// kernel: tpu_custom_call.1
$region0: #{tpu_custom_call.1}
  #allocation0 [shape = 'u32[]', space=smem, size = 0x4, offset = 0x4, fixed_abs, tag = 'smem constant byte address 0x4 - core index']
  #allocation1 [shape = 'u32[144,128]{1,0:T(1,128)}', space=vmem, size = 0x12000, scoped, tag = 'internal scratch']
  #allocation2 [shape = 'f32[1]{0:T(128)S(6)}', space=smem, size = 0x200, scoped, tag = 'scoped memory for tpu_custom_call.1']
  %s0 = inlined_call_operand.hbm [shape: f32[2,8,128], index: 0, kind: input, shape index: {}]
  %s1 = inlined_call_operand.hbm [shape: f32[128,128], index: 1, kind: input, shape index: {}]
  %s2 = inlined_call_operand.vmem [shape: f32[1,128], index: 2, kind: input, shape index: {}]
  %s3 = inlined_call_operand.vmem [shape: f32[1,128], index: 3, kind: input, shape index: {}]
  %s4 = inlined_call_operand.vmem [shape: f32[1,128], index: 4, kind: input, shape index: {}]
  %s5 = inlined_call_operand.hbm [shape: f32[128,128], index: 5, kind: input, shape index: {}]
  %s6 = inlined_call_operand.vmem [shape: f32[1,128], index: 6, kind: input, shape index: {}]
  %s7 = inlined_call_operand.hbm [shape: f32[128,128], index: 7, kind: input, shape index: {}]
  %s8 = inlined_call_operand.vmem [shape: f32[1,128], index: 8, kind: input, shape index: {}]
  %s9 = inlined_call_operand.hbm [shape: f32[128,128], index: 9, kind: input, shape index: {}]
  %s10 = inlined_call_operand.vmem [shape: f32[1,128], index: 10, kind: input, shape index: {}]
  %s11 = inlined_call_operand.hbm [shape: f32[128,128], index: 11, kind: input, shape index: {}]
  %s12 = inlined_call_operand.vmem [shape: f32[1,128], index: 12, kind: input, shape index: {}]
  %s13 = inlined_call_operand.hbm [shape: f32[128,128], index: 13, kind: input, shape index: {}]
  %s14 = inlined_call_operand.vmem [shape: f32[1,128], index: 14, kind: input, shape index: {}]
  %s15 = inlined_call_operand.vmem [shape: f32[1,128], index: 15, kind: input, shape index: {}]
  %s16 = inlined_call_operand.vmem [shape: f32[1,128], index: 16, kind: input, shape index: {}]
  %s17 = inlined_call_operand.<no memory space> [shape: f32[1], index: 17, kind: input, shape index: {}]
  %s18 = inlined_call_operand.hbm [shape: f32[2,8,128], index: 18, kind: output, shape index: {}]
  %s19 = sld [smem:[#allocation0]]
  $region133: #{tpu_custom_call.1} parent=0
    _
  %s21 = ssub.s32 1, %s19
  %s22 = scalar_select 0, %s21, %s19
  %23 = sst [smem:[#allocation2]] %s17
  $region1: #{tpu_custom_call.1} parent=0
    #allocation3 [shape = 'u8[8192]{0}', space=vmem, size = 0x2000, scoped, tag = 'input window, operand 0']
    #allocation4 [shape = 's32[2]{0}', space=sflag, size = 0x8, scoped, tag = 'scoped memory for tpu_custom_call.1']
    #allocation5 [shape = 's32[2]{0}', space=sflag, size = 0x8, scoped, tag = 'scoped memory for tpu_custom_call.1']
    #allocation6 [shape = 'u8[65536]{0}', space=vmem, size = 0x10000, scoped, tag = 'input window, operand 1, single buffered']
    #allocation7 [shape = 's32[1]{0}', space=sflag, size = 0x4, scoped, tag = 'scoped memory for tpu_custom_call.1']
    #allocation8 [shape = 'u8[65536]{0}', space=vmem, size = 0x10000, scoped, tag = 'input window, operand 5, single buffered']
    #allocation9 [shape = 'u8[65536]{0}', space=vmem, size = 0x10000, scoped, tag = 'input window, operand 7, single buffered']
    #allocation10 [shape = 's32[1]{0}', space=sflag, size = 0x4, scoped, tag = 'scoped memory for tpu_custom_call.1']
    #allocation11 [shape = 'u8[65536]{0}', space=vmem, size = 0x10000, scoped, tag = 'input window, operand 9, single buffered']
    #allocation12 [shape = 'u8[65536]{0}', space=vmem, size = 0x10000, scoped, tag = 'input window, operand 11, single buffered']
    #allocation13 [shape = 's32[1]{0}', space=sflag, size = 0x4, scoped, tag = 'scoped memory for tpu_custom_call.1']
    #allocation14 [shape = 'u8[65536]{0}', space=vmem, size = 0x10000, scoped, tag = 'input window, operand 13, single buffered']
    #allocation15 [shape = 'u8[8192]{0}', space=vmem, size = 0x2000, scoped, tag = 'output window, operand 0']
    %24 = vsyncpa [#allocation4], 0
    %s25 = scalar_lea.sflag [#allocation4], 1
    %26 = vsyncpa %s25, 0
    %27 = vsyncpa [#allocation7], 0
    %28 = vsyncpa [#allocation10], 0
    %29 = vsyncpa [#allocation13], 0
    %30 = vsyncpa [#allocation5], 0
    %s31 = scalar_lea.sflag [#allocation5], 1
    %32 = vsyncpa %s31, 0
    loop: start=0, step=1, limit=4
    $region2: #{tpu_custom_call.1} parent=1 // loop_pre_header
      _
    $region3: #{tpu_custom_call.1} parent=1 // loop_header
      %s34 = sphi 0, %s38
      %p35 = scmp.ge.s32.totalorder %s34, 4
      %s44 = sphi 0, %s46
      %s47 = sphi 0, %s44
      %s48 = sphi 0, %s47
      %s64 = sphi 0, %s48
      %s68 = sphi 0, %s68
      %s70 = sphi 0, %s68
      %s71 = sphi 0, %s70
      %s85 = sphi 0, %s71
      %s89 = sphi 0, %s89
      %s91 = sphi 0, %s89
      %s92 = sphi 0, %s91
      %s106 = sphi 0, %s92
      %s110 = sphi 0, %s110
      %s112 = sphi 0, %s110
      %s113 = sphi 0, %s112
      %s127 = sphi 0, %s113
      %s131 = sphi 0, %s131
      %s133 = sphi 0, %s131
      %s134 = sphi 0, %s133
      %s148 = sphi 0, %s134
      %s152 = sphi 0, %s152
      %s154 = sphi 0, %s152
      %s155 = sphi 0, %s154
      %s169 = sphi 0, %s155
      %s173 = sphi 0, %s173
      %s175 = sphi 0, %s173
      %s176 = sphi 0, %s175
      %s190 = sphi 0, %s176
      %s194 = sphi 0, %s194
      %s196 = sphi 0, %s194
      %s197 = sphi 0, %s196
      %s211 = sphi 0, %s197
      %s215 = sphi 0, %s215
      %s217 = sphi 0, %s215
      %s218 = sphi 0, %s217
      %s232 = sphi 0, %s218
      %s236 = sphi 0, %s236
      %s238 = sphi 0, %s236
      %s239 = sphi 0, %s238
      %s253 = sphi 0, %s239
      %s257 = sphi 0, %s257
      %s259 = sphi 0, %s257
      %s260 = sphi 0, %s259
      %s274 = sphi 0, %s260
      %s278 = sphi 0, %s278
      %s280 = sphi 0, %s278
      %s281 = sphi 0, %s280
      %s295 = sphi 0, %s281
      %s299 = sphi 0, %s299
      %s301 = sphi 0, %s299
      %s302 = sphi 0, %s301
      %s316 = sphi 0, %s302
      %s320 = sphi 0, %s320
      %s322 = sphi 0, %s320
      %s323 = sphi 0, %s322
      %s337 = sphi 0, %s323
      %s341 = sphi 0, %s341
      %s343 = sphi 0, %s341
      %s344 = sphi 0, %s343
      %s358 = sphi 0, %s344
      %s362 = sphi 0, %s362
      %s364 = sphi 0, %s362
      %s365 = sphi 0, %s364
      %s379 = sphi 0, %s365
      %s383 = sphi 0, %s383
      %s385 = sphi 0, %s383
      %s386 = sphi 0, %s385
      %s400 = sphi 0, %s386
      %s404 = sphi 0, %s404
      %s406 = sphi 0, %s404
      %s407 = sphi 0, %s406
      %s421 = sphi 0, %s407
      %s427 = sphi 0, %s429
      %s430 = sphi 0, %s427
      %s431 = sphi 0, %s430
      %s447 = sphi 0, %s431
    $region4: #{tpu_custom_call.1} parent=1 // loop_header_branch
      %37 = sbr.rel (%p35) target = $region8
    $region5: #{tpu_custom_call.1} parent=1 // loop_body
      %s39 = ssub.s32 %s34, 1
      %s40 = ssub.s32 %s34, 2
      %s41 = sadd.s32 %s34, 1
      %s42 = ssub.s32 %s34, %s41
      %p43 = scmp.eq.s32.totalorder %s42, 0
      %s45 = sadd.s32 %s44, 1
      %s46 = scalar_select %p43, %s44, %s45
      %p49 = pneg %p43
      %p50 = scmp.eq.s32.totalorder %s34, 1
      %p51 = por %p49, %p50
      %p52 = scmp.ne.s32.totalorder %s44, %s47
      %p53 = scmp.eq.s32.totalorder %s34, 0
      %p54 = por %p52, %p53
      %p55 = scmp.ne.s32.totalorder %s44, %s47
      %p56 = scmp.eq.s32.totalorder %s39, 1
      %p57 = por %p55, %p56
      %p58 = scmp.ne.s32.totalorder %s47, %s48
      %p59 = scmp.eq.s32.totalorder %s39, 0
      %p60 = por %p58, %p59
      %p61 = scmp.ne.s32.totalorder %s47, %s48
      %p62 = scmp.eq.s32.totalorder %s40, 1
      %p63 = por %p61, %p62
      %p65 = scmp.ne.s32.totalorder %s48, %s64
      %p66 = scmp.eq.s32.totalorder %s40, 0
      %p67 = por %p65, %p66
      %s69 = sadd.s32 %s68, 1
      %p72 = scmp.eq.s32.totalorder %s34, 1
      %p73 = scmp.ne.s32.totalorder %s68, %s70
      %p74 = scmp.eq.s32.totalorder %s34, 0
      %p75 = por %p73, %p74
      %p76 = scmp.ne.s32.totalorder %s68, %s70
      %p77 = scmp.eq.s32.totalorder %s39, 1
      %p78 = por %p76, %p77
      %p79 = scmp.ne.s32.totalorder %s70, %s71
      %p80 = scmp.eq.s32.totalorder %s39, 0
      %p81 = por %p79, %p80
      %p82 = scmp.ne.s32.totalorder %s70, %s71
      %p83 = scmp.eq.s32.totalorder %s40, 1
      %p84 = por %p82, %p83
      %p86 = scmp.ne.s32.totalorder %s71, %s85
      %p87 = scmp.eq.s32.totalorder %s40, 0
      %p88 = por %p86, %p87
      %s90 = sadd.s32 %s89, 1
      %p93 = scmp.eq.s32.totalorder %s34, 1
      %p94 = scmp.ne.s32.totalorder %s89, %s91
      %p95 = scmp.eq.s32.totalorder %s34, 0
      %p96 = por %p94, %p95
      %p97 = scmp.ne.s32.totalorder %s89, %s91
      %p98 = scmp.eq.s32.totalorder %s39, 1
      %p99 = por %p97, %p98
      %p100 = scmp.ne.s32.totalorder %s91, %s92
      %p101 = scmp.eq.s32.totalorder %s39, 0
      %p102 = por %p100, %p101
      %p103 = scmp.ne.s32.totalorder %s91, %s92
      %p104 = scmp.eq.s32.totalorder %s40, 1
      %p105 = por %p103, %p104
      %p107 = scmp.ne.s32.totalorder %s92, %s106
      %p108 = scmp.eq.s32.totalorder %s40, 0
      %p109 = por %p107, %p108
      %s111 = sadd.s32 %s110, 1
      %p114 = scmp.eq.s32.totalorder %s34, 1
      %p115 = scmp.ne.s32.totalorder %s110, %s112
      %p116 = scmp.eq.s32.totalorder %s34, 0
      %p117 = por %p115, %p116
      %p118 = scmp.ne.s32.totalorder %s110, %s112
      %p119 = scmp.eq.s32.totalorder %s39, 1
      %p120 = por %p118, %p119
      %p121 = scmp.ne.s32.totalorder %s112, %s113
      %p122 = scmp.eq.s32.totalorder %s39, 0
      %p123 = por %p121, %p122
      %p124 = scmp.ne.s32.totalorder %s112, %s113
      %p125 = scmp.eq.s32.totalorder %s40, 1
      %p126 = por %p124, %p125
      %p128 = scmp.ne.s32.totalorder %s113, %s127
      %p129 = scmp.eq.s32.totalorder %s40, 0
      %p130 = por %p128, %p129
      %s132 = sadd.s32 %s131, 1
      %p135 = scmp.eq.s32.totalorder %s34, 1
      %p136 = scmp.ne.s32.totalorder %s131, %s133
      %p137 = scmp.eq.s32.totalorder %s34, 0
      %p138 = por %p136, %p137
      %p139 = scmp.ne.s32.totalorder %s131, %s133
      %p140 = scmp.eq.s32.totalorder %s39, 1
      %p141 = por %p139, %p140
      %p142 = scmp.ne.s32.totalorder %s133, %s134
      %p143 = scmp.eq.s32.totalorder %s39, 0
      %p144 = por %p142, %p143
      %p145 = scmp.ne.s32.totalorder %s133, %s134
      %p146 = scmp.eq.s32.totalorder %s40, 1
      %p147 = por %p145, %p146
      %p149 = scmp.ne.s32.totalorder %s134, %s148
      %p150 = scmp.eq.s32.totalorder %s40, 0
      %p151 = por %p149, %p150
      %s153 = sadd.s32 %s152, 1
      %p156 = scmp.eq.s32.totalorder %s34, 1
      %p157 = scmp.ne.s32.totalorder %s152, %s154
      %p158 = scmp.eq.s32.totalorder %s34, 0
      %p159 = por %p157, %p158
      %p160 = scmp.ne.s32.totalorder %s152, %s154
      %p161 = scmp.eq.s32.totalorder %s39, 1
      %p162 = por %p160, %p161
      %p163 = scmp.ne.s32.totalorder %s154, %s155
      %p164 = scmp.eq.s32.totalorder %s39, 0
      %p165 = por %p163, %p164
      %p166 = scmp.ne.s32.totalorder %s154, %s155
      %p167 = scmp.eq.s32.totalorder %s40, 1
      %p168 = por %p166, %p167
      %p170 = scmp.ne.s32.totalorder %s155, %s169
      %p171 = scmp.eq.s32.totalorder %s40, 0
      %p172 = por %p170, %p171
      %s174 = sadd.s32 %s173, 1
      %p177 = scmp.eq.s32.totalorder %s34, 1
      %p178 = scmp.ne.s32.totalorder %s173, %s175
      %p179 = scmp.eq.s32.totalorder %s34, 0
      %p180 = por %p178, %p179
      %p181 = scmp.ne.s32.totalorder %s173, %s175
      %p182 = scmp.eq.s32.totalorder %s39, 1
      %p183 = por %p181, %p182
      %p184 = scmp.ne.s32.totalorder %s175, %s176
      %p185 = scmp.eq.s32.totalorder %s39, 0
      %p186 = por %p184, %p185
      %p187 = scmp.ne.s32.totalorder %s175, %s176
      %p188 = scmp.eq.s32.totalorder %s40, 1
      %p189 = por %p187, %p188
      %p191 = scmp.ne.s32.totalorder %s176, %s190
      %p192 = scmp.eq.s32.totalorder %s40, 0
      %p193 = por %p191, %p192
      %s195 = sadd.s32 %s194, 1
      %p198 = scmp.eq.s32.totalorder %s34, 1
      %p199 = scmp.ne.s32.totalorder %s194, %s196
      %p200 = scmp.eq.s32.totalorder %s34, 0
      %p201 = por %p199, %p200
      %p202 = scmp.ne.s32.totalorder %s194, %s196
      %p203 = scmp.eq.s32.totalorder %s39, 1
      %p204 = por %p202, %p203
      %p205 = scmp.ne.s32.totalorder %s196, %s197
      %p206 = scmp.eq.s32.totalorder %s39, 0
      %p207 = por %p205, %p206
      %p208 = scmp.ne.s32.totalorder %s196, %s197
      %p209 = scmp.eq.s32.totalorder %s40, 1
      %p210 = por %p208, %p209
      %p212 = scmp.ne.s32.totalorder %s197, %s211
      %p213 = scmp.eq.s32.totalorder %s40, 0
      %p214 = por %p212, %p213
      %s216 = sadd.s32 %s215, 1
      %p219 = scmp.eq.s32.totalorder %s34, 1
      %p220 = scmp.ne.s32.totalorder %s215, %s217
      %p221 = scmp.eq.s32.totalorder %s34, 0
      %p222 = por %p220, %p221
      %p223 = scmp.ne.s32.totalorder %s215, %s217
      %p224 = scmp.eq.s32.totalorder %s39, 1
      %p225 = por %p223, %p224
      %p226 = scmp.ne.s32.totalorder %s217, %s218
      %p227 = scmp.eq.s32.totalorder %s39, 0
      %p228 = por %p226, %p227
      %p229 = scmp.ne.s32.totalorder %s217, %s218
      %p230 = scmp.eq.s32.totalorder %s40, 1
      %p231 = por %p229, %p230
      %p233 = scmp.ne.s32.totalorder %s218, %s232
      %p234 = scmp.eq.s32.totalorder %s40, 0
      %p235 = por %p233, %p234
      %s237 = sadd.s32 %s236, 1
      %p240 = scmp.eq.s32.totalorder %s34, 1
      %p241 = scmp.ne.s32.totalorder %s236, %s238
      %p242 = scmp.eq.s32.totalorder %s34, 0
      %p243 = por %p241, %p242
      %p244 = scmp.ne.s32.totalorder %s236, %s238
      %p245 = scmp.eq.s32.totalorder %s39, 1
      %p246 = por %p244, %p245
      %p247 = scmp.ne.s32.totalorder %s238, %s239
      %p248 = scmp.eq.s32.totalorder %s39, 0
      %p249 = por %p247, %p248
      %p250 = scmp.ne.s32.totalorder %s238, %s239
      %p251 = scmp.eq.s32.totalorder %s40, 1
      %p252 = por %p250, %p251
      %p254 = scmp.ne.s32.totalorder %s239, %s253
      %p255 = scmp.eq.s32.totalorder %s40, 0
      %p256 = por %p254, %p255
      %s258 = sadd.s32 %s257, 1
      %p261 = scmp.eq.s32.totalorder %s34, 1
      %p262 = scmp.ne.s32.totalorder %s257, %s259
      %p263 = scmp.eq.s32.totalorder %s34, 0
      %p264 = por %p262, %p263
      %p265 = scmp.ne.s32.totalorder %s257, %s259
      %p266 = scmp.eq.s32.totalorder %s39, 1
      %p267 = por %p265, %p266
      %p268 = scmp.ne.s32.totalorder %s259, %s260
      %p269 = scmp.eq.s32.totalorder %s39, 0
      %p270 = por %p268, %p269
      %p271 = scmp.ne.s32.totalorder %s259, %s260
      %p272 = scmp.eq.s32.totalorder %s40, 1
      %p273 = por %p271, %p272
      %p275 = scmp.ne.s32.totalorder %s260, %s274
      %p276 = scmp.eq.s32.totalorder %s40, 0
      %p277 = por %p275, %p276
      %s279 = sadd.s32 %s278, 1
      %p282 = scmp.eq.s32.totalorder %s34, 1
      %p283 = scmp.ne.s32.totalorder %s278, %s280
      %p284 = scmp.eq.s32.totalorder %s34, 0
      %p285 = por %p283, %p284
      %p286 = scmp.ne.s32.totalorder %s278, %s280
      %p287 = scmp.eq.s32.totalorder %s39, 1
      %p288 = por %p286, %p287
      %p289 = scmp.ne.s32.totalorder %s280, %s281
      %p290 = scmp.eq.s32.totalorder %s39, 0
      %p291 = por %p289, %p290
      %p292 = scmp.ne.s32.totalorder %s280, %s281
      %p293 = scmp.eq.s32.totalorder %s40, 1
      %p294 = por %p292, %p293
      %p296 = scmp.ne.s32.totalorder %s281, %s295
      %p297 = scmp.eq.s32.totalorder %s40, 0
      %p298 = por %p296, %p297
      %s300 = sadd.s32 %s299, 1
      %p303 = scmp.eq.s32.totalorder %s34, 1
      %p304 = scmp.ne.s32.totalorder %s299, %s301
      %p305 = scmp.eq.s32.totalorder %s34, 0
      %p306 = por %p304, %p305
      %p307 = scmp.ne.s32.totalorder %s299, %s301
      %p308 = scmp.eq.s32.totalorder %s39, 1
      %p309 = por %p307, %p308
      %p310 = scmp.ne.s32.totalorder %s301, %s302
      %p311 = scmp.eq.s32.totalorder %s39, 0
      %p312 = por %p310, %p311
      %p313 = scmp.ne.s32.totalorder %s301, %s302
      %p314 = scmp.eq.s32.totalorder %s40, 1
      %p315 = por %p313, %p314
      %p317 = scmp.ne.s32.totalorder %s302, %s316
      %p318 = scmp.eq.s32.totalorder %s40, 0
      %p319 = por %p317, %p318
      %s321 = sadd.s32 %s320, 1
      %p324 = scmp.eq.s32.totalorder %s34, 1
      %p325 = scmp.ne.s32.totalorder %s320, %s322
      %p326 = scmp.eq.s32.totalorder %s34, 0
      %p327 = por %p325, %p326
      %p328 = scmp.ne.s32.totalorder %s320, %s322
      %p329 = scmp.eq.s32.totalorder %s39, 1
      %p330 = por %p328, %p329
      %p331 = scmp.ne.s32.totalorder %s322, %s323
      %p332 = scmp.eq.s32.totalorder %s39, 0
      %p333 = por %p331, %p332
      %p334 = scmp.ne.s32.totalorder %s322, %s323
      %p335 = scmp.eq.s32.totalorder %s40, 1
      %p336 = por %p334, %p335
      %p338 = scmp.ne.s32.totalorder %s323, %s337
      %p339 = scmp.eq.s32.totalorder %s40, 0
      %p340 = por %p338, %p339
      %s342 = sadd.s32 %s341, 1
      %p345 = scmp.eq.s32.totalorder %s34, 1
      %p346 = scmp.ne.s32.totalorder %s341, %s343
      %p347 = scmp.eq.s32.totalorder %s34, 0
      %p348 = por %p346, %p347
      %p349 = scmp.ne.s32.totalorder %s341, %s343
      %p350 = scmp.eq.s32.totalorder %s39, 1
      %p351 = por %p349, %p350
      %p352 = scmp.ne.s32.totalorder %s343, %s344
      %p353 = scmp.eq.s32.totalorder %s39, 0
      %p354 = por %p352, %p353
      %p355 = scmp.ne.s32.totalorder %s343, %s344
      %p356 = scmp.eq.s32.totalorder %s40, 1
      %p357 = por %p355, %p356
      %p359 = scmp.ne.s32.totalorder %s344, %s358
      %p360 = scmp.eq.s32.totalorder %s40, 0
      %p361 = por %p359, %p360
      %s363 = sadd.s32 %s362, 1
      %p366 = scmp.eq.s32.totalorder %s34, 1
      %p367 = scmp.ne.s32.totalorder %s362, %s364
      %p368 = scmp.eq.s32.totalorder %s34, 0
      %p369 = por %p367, %p368
      %p370 = scmp.ne.s32.totalorder %s362, %s364
      %p371 = scmp.eq.s32.totalorder %s39, 1
      %p372 = por %p370, %p371
      %p373 = scmp.ne.s32.totalorder %s364, %s365
      %p374 = scmp.eq.s32.totalorder %s39, 0
      %p375 = por %p373, %p374
      %p376 = scmp.ne.s32.totalorder %s364, %s365
      %p377 = scmp.eq.s32.totalorder %s40, 1
      %p378 = por %p376, %p377
      %p380 = scmp.ne.s32.totalorder %s365, %s379
      %p381 = scmp.eq.s32.totalorder %s40, 0
      %p382 = por %p380, %p381
      %s384 = sadd.s32 %s383, 1
      %p387 = scmp.eq.s32.totalorder %s34, 1
      %p388 = scmp.ne.s32.totalorder %s383, %s385
      %p389 = scmp.eq.s32.totalorder %s34, 0
      %p390 = por %p388, %p389
      %p391 = scmp.ne.s32.totalorder %s383, %s385
      %p392 = scmp.eq.s32.totalorder %s39, 1
      %p393 = por %p391, %p392
      %p394 = scmp.ne.s32.totalorder %s385, %s386
      %p395 = scmp.eq.s32.totalorder %s39, 0
      %p396 = por %p394, %p395
      %p397 = scmp.ne.s32.totalorder %s385, %s386
      %p398 = scmp.eq.s32.totalorder %s40, 1
      %p399 = por %p397, %p398
      %p401 = scmp.ne.s32.totalorder %s386, %s400
      %p402 = scmp.eq.s32.totalorder %s40, 0
      %p403 = por %p401, %p402
      %s405 = sadd.s32 %s404, 1
      %p408 = scmp.eq.s32.totalorder %s34, 1
      %p409 = scmp.ne.s32.totalorder %s404, %s406
      %p410 = scmp.eq.s32.totalorder %s34, 0
      %p411 = por %p409, %p410
      %p412 = scmp.ne.s32.totalorder %s404, %s406
      %p413 = scmp.eq.s32.totalorder %s39, 1
      %p414 = por %p412, %p413
      %p415 = scmp.ne.s32.totalorder %s406, %s407
      %p416 = scmp.eq.s32.totalorder %s39, 0
      %p417 = por %p415, %p416
      %p418 = scmp.ne.s32.totalorder %s406, %s407
      %p419 = scmp.eq.s32.totalorder %s40, 1
      %p420 = por %p418, %p419
      %p422 = scmp.ne.s32.totalorder %s407, %s421
      %p423 = scmp.eq.s32.totalorder %s40, 0
      %p424 = por %p422, %p423
      %s425 = ssub.s32 %s34, %s41
      %p426 = scmp.eq.s32.totalorder %s425, 0
      %s428 = sadd.s32 %s427, 1
      %s429 = scalar_select %p426, %s427, %s428
      %p432 = pneg %p426
      %p433 = scmp.eq.s32.totalorder %s34, 1
      %p434 = por %p432, %p433
      %p435 = scmp.ne.s32.totalorder %s427, %s430
      %p436 = scmp.eq.s32.totalorder %s34, 0
      %p437 = por %p435, %p436
      %p438 = scmp.ne.s32.totalorder %s427, %s430
      %p439 = scmp.eq.s32.totalorder %s39, 1
      %p440 = por %p438, %p439
      %p441 = scmp.ne.s32.totalorder %s430, %s431
      %p442 = scmp.eq.s32.totalorder %s39, 0
      %p443 = por %p441, %p442
      %p444 = scmp.ne.s32.totalorder %s430, %s431
      %p445 = scmp.eq.s32.totalorder %s40, 1
      %p446 = por %p444, %p445
      %p448 = scmp.ne.s32.totalorder %s431, %s447
      %p449 = scmp.eq.s32.totalorder %s40, 0
      %p450 = por %p448, %p449
      %p451 = scmp.le.s32.totalorder 1, %s34
      %p452 = scmp.lt.s32.totalorder %s34, 3
      %p453 = pnand %p451, %p452
      %p454 = pneg %p453
      // Predicated region
      $region9: #{tpu_custom_call.1} parent=5 // pred_check
        _
      $region10: #{tpu_custom_call.1} parent=5 // pred_check_branch
        %456 = sbr.rel (%p453) target = $region12
      $region11: #{tpu_custom_call.1} parent=5 // pred_region
        %s457 = ssub.s32 %s34, 1
        // Predicated region
        $region13: #{tpu_custom_call.1} parent=11 // pred_check
          %p458 = pneg %p81
        $region14: #{tpu_custom_call.1} parent=11 // pred_check_branch
          %460 = sbr.rel (%p458) target = $region16
        $region15: #{tpu_custom_call.1} parent=11 // pred_region
          %s462 = ssub.s32 2048, 2048
          %463 = vsyncadd [#allocation7], %s462
          %s464 = sshll.u32 [#allocation6], 4
          %s465 = int_to_ptr.vmem [resolvable:$true] %s464
          %470 = dma.hbm_to_vmem [thread:$0]  %s1, 2048, %s465, [#allocation7], 128, 128, 8
        $region16: #{tpu_custom_call.1} parent=11 // pred_fallthru
          _
        // Predicated region
        $region17: #{tpu_custom_call.1} parent=11 // pred_check
          %p471 = pneg %p102
        $region18: #{tpu_custom_call.1} parent=11 // pred_check_branch
          %473 = sbr.rel (%p471) target = $region20
        $region19: #{tpu_custom_call.1} parent=11 // pred_region
          _
        $region20: #{tpu_custom_call.1} parent=11 // pred_fallthru
          _
        // Predicated region
        $region21: #{tpu_custom_call.1} parent=11 // pred_check
          %p474 = pneg %p123
        $region22: #{tpu_custom_call.1} parent=11 // pred_check_branch
          %476 = sbr.rel (%p474) target = $region24
        $region23: #{tpu_custom_call.1} parent=11 // pred_region
          _
        $region24: #{tpu_custom_call.1} parent=11 // pred_fallthru
          _
        // Predicated region
        $region25: #{tpu_custom_call.1} parent=11 // pred_check
          %p477 = pneg %p144
        $region26: #{tpu_custom_call.1} parent=11 // pred_check_branch
          %479 = sbr.rel (%p477) target = $region28
        $region27: #{tpu_custom_call.1} parent=11 // pred_region
          _
        $region28: #{tpu_custom_call.1} parent=11 // pred_fallthru
          _
        // Predicated region
        $region29: #{tpu_custom_call.1} parent=11 // pred_check
          %p480 = pneg %p165
        $region30: #{tpu_custom_call.1} parent=11 // pred_check_branch
          %482 = sbr.rel (%p480) target = $region32
        $region31: #{tpu_custom_call.1} parent=11 // pred_region
          %s484 = ssub.s32 2048, 2048
          %485 = vsyncadd [#allocation7], %s484
          %s486 = sshll.u32 [#allocation8], 4
          %s487 = int_to_ptr.vmem [resolvable:$true] %s486
          %492 = dma.hbm_to_vmem [thread:$0]  %s5, 2048, %s487, [#allocation7], 128, 128, 8
        $region32: #{tpu_custom_call.1} parent=11 // pred_fallthru
          _
        // Predicated region
        $region33: #{tpu_custom_call.1} parent=11 // pred_check
          %p493 = pneg %p186
        $region34: #{tpu_custom_call.1} parent=11 // pred_check_branch
          %495 = sbr.rel (%p493) target = $region36
        $region35: #{tpu_custom_call.1} parent=11 // pred_region
          _
        $region36: #{tpu_custom_call.1} parent=11 // pred_fallthru
          _
        // Predicated region
        $region37: #{tpu_custom_call.1} parent=11 // pred_check
          %p496 = pneg %p207
        $region38: #{tpu_custom_call.1} parent=11 // pred_check_branch
          %498 = sbr.rel (%p496) target = $region40
        $region39: #{tpu_custom_call.1} parent=11 // pred_region
          %s500 = ssub.s32 2048, 2048
          %501 = vsyncadd [#allocation10], %s500
          %s502 = sshll.u32 [#allocation9], 4
          %s503 = int_to_ptr.vmem [resolvable:$true] %s502
          %508 = dma.hbm_to_vmem [thread:$0]  %s7, 2048, %s503, [#allocation10], 128, 128, 8
        $region40: #{tpu_custom_call.1} parent=11 // pred_fallthru
          _
        // Predicated region
        $region41: #{tpu_custom_call.1} parent=11 // pred_check
          %p509 = pneg %p228
        $region42: #{tpu_custom_call.1} parent=11 // pred_check_branch
          %511 = sbr.rel (%p509) target = $region44
        $region43: #{tpu_custom_call.1} parent=11 // pred_region
          _
        $region44: #{tpu_custom_call.1} parent=11 // pred_fallthru
          _
        // Predicated region
        $region45: #{tpu_custom_call.1} parent=11 // pred_check
          %p512 = pneg %p249
        $region46: #{tpu_custom_call.1} parent=11 // pred_check_branch
          %514 = sbr.rel (%p512) target = $region48
        $region47: #{tpu_custom_call.1} parent=11 // pred_region
          %s516 = ssub.s32 2048, 2048
          %517 = vsyncadd [#allocation10], %s516
          %s518 = sshll.u32 [#allocation11], 4
          %s519 = int_to_ptr.vmem [resolvable:$true] %s518
          %524 = dma.hbm_to_vmem [thread:$0]  %s9, 2048, %s519, [#allocation10], 128, 128, 8
        $region48: #{tpu_custom_call.1} parent=11 // pred_fallthru
          _
        // Predicated region
        $region49: #{tpu_custom_call.1} parent=11 // pred_check
          %p525 = pneg %p270
        $region50: #{tpu_custom_call.1} parent=11 // pred_check_branch
          %527 = sbr.rel (%p525) target = $region52
        $region51: #{tpu_custom_call.1} parent=11 // pred_region
          _
        $region52: #{tpu_custom_call.1} parent=11 // pred_fallthru
          _
        // Predicated region
        $region53: #{tpu_custom_call.1} parent=11 // pred_check
          %p528 = pneg %p291
        $region54: #{tpu_custom_call.1} parent=11 // pred_check_branch
          %530 = sbr.rel (%p528) target = $region56
        $region55: #{tpu_custom_call.1} parent=11 // pred_region
          %s532 = ssub.s32 2048, 2048
          %533 = vsyncadd [#allocation13], %s532
          %s534 = sshll.u32 [#allocation12], 4
          %s535 = int_to_ptr.vmem [resolvable:$true] %s534
          %540 = dma.hbm_to_vmem [thread:$0]  %s11, 2048, %s535, [#allocation13], 128, 128, 8
        $region56: #{tpu_custom_call.1} parent=11 // pred_fallthru
          _
        // Predicated region
        $region57: #{tpu_custom_call.1} parent=11 // pred_check
          %p541 = pneg %p312
        $region58: #{tpu_custom_call.1} parent=11 // pred_check_branch
          %543 = sbr.rel (%p541) target = $region60
        $region59: #{tpu_custom_call.1} parent=11 // pred_region
          _
        $region60: #{tpu_custom_call.1} parent=11 // pred_fallthru
          _
        // Predicated region
        $region61: #{tpu_custom_call.1} parent=11 // pred_check
          %p544 = pneg %p333
        $region62: #{tpu_custom_call.1} parent=11 // pred_check_branch
          %546 = sbr.rel (%p544) target = $region64
        $region63: #{tpu_custom_call.1} parent=11 // pred_region
          %s548 = ssub.s32 2048, 2048
          %549 = vsyncadd [#allocation13], %s548
          %s550 = sshll.u32 [#allocation14], 4
          %s551 = int_to_ptr.vmem [resolvable:$true] %s550
          %556 = dma.hbm_to_vmem [thread:$0]  %s13, 2048, %s551, [#allocation13], 128, 128, 8
        $region64: #{tpu_custom_call.1} parent=11 // pred_fallthru
          _
        // Predicated region
        $region65: #{tpu_custom_call.1} parent=11 // pred_check
          %p557 = pneg %p354
        $region66: #{tpu_custom_call.1} parent=11 // pred_check_branch
          %559 = sbr.rel (%p557) target = $region68
        $region67: #{tpu_custom_call.1} parent=11 // pred_region
          _
        $region68: #{tpu_custom_call.1} parent=11 // pred_fallthru
          _
        // Predicated region
        $region69: #{tpu_custom_call.1} parent=11 // pred_check
          %p560 = pneg %p375
        $region70: #{tpu_custom_call.1} parent=11 // pred_check_branch
          %562 = sbr.rel (%p560) target = $region72
        $region71: #{tpu_custom_call.1} parent=11 // pred_region
          _
        $region72: #{tpu_custom_call.1} parent=11 // pred_fallthru
          _
        // Predicated region
        $region73: #{tpu_custom_call.1} parent=11 // pred_check
          %p563 = pneg %p396
        $region74: #{tpu_custom_call.1} parent=11 // pred_check_branch
          %565 = sbr.rel (%p563) target = $region76
        $region75: #{tpu_custom_call.1} parent=11 // pred_region
          _
        $region76: #{tpu_custom_call.1} parent=11 // pred_fallthru
          _
        // Predicated region
        $region77: #{tpu_custom_call.1} parent=11 // pred_check
          %p566 = pneg %p417
        $region78: #{tpu_custom_call.1} parent=11 // pred_check_branch
          %568 = sbr.rel (%p566) target = $region80
        $region79: #{tpu_custom_call.1} parent=11 // pred_region
          _
        $region80: #{tpu_custom_call.1} parent=11 // pred_fallthru
          _
      $region12: #{tpu_custom_call.1} parent=5 // pred_fallthru
        _
      %p569 = scmp.lt.s32.totalorder %s34, 2
      // Predicated region
      $region81: #{tpu_custom_call.1} parent=5 // pred_check
        %p570 = pneg %p569
      $region82: #{tpu_custom_call.1} parent=5 // pred_check_branch
        %572 = sbr.rel (%p570) target = $region84
      $region83: #{tpu_custom_call.1} parent=5 // pred_region
        // Predicated region
        $region85: #{tpu_custom_call.1} parent=83 // pred_check
          %p573 = pneg %p54
        $region86: #{tpu_custom_call.1} parent=83 // pred_check_branch
          %575 = sbr.rel (%p573) target = $region88
        $region87: #{tpu_custom_call.1} parent=83 // pred_region
          %s576 = sand.u32 %s44, 1
          %s577 = scalar_lea.sflag [#allocation4], %s576
          %s578 = sand.u32 %s44, 1
          %s579 = smul.addr %s578, 8
          %s580 = scalar_lea.vmem [#allocation3], %s579
          %s582 = ssub.s32 128, 128
          %583 = vsyncadd %s577, %s582
          %s584 = smul.addr %s34, 128
          %s585 = scalar_lea.hbm %s0, %s584
          %s587 = sshll.u32 %s580, 4
          %s588 = int_to_ptr.vmem [resolvable:$true] %s587
          %590 = dma.hbm_to_vmem [thread:$0]  %s585, 128, %s588, %s577
        $region88: #{tpu_custom_call.1} parent=83 // pred_fallthru
          _
      $region84: #{tpu_custom_call.1} parent=5 // pred_fallthru
        _
      %p591 = scmp.le.s32.totalorder 1, %s34
      %p592 = scmp.lt.s32.totalorder %s34, 3
      %p593 = pnand %p591, %p592
      %p594 = pneg %p593
      // Predicated region
      $region89: #{tpu_custom_call.1} parent=5 // pred_check
        _
      $region90: #{tpu_custom_call.1} parent=5 // pred_check_branch
        %596 = sbr.rel (%p593) target = $region92
      $region91: #{tpu_custom_call.1} parent=5 // pred_region
        %s597 = ssub.s32 %s34, 1
        %s598 = sand.u32 %s47, 1
        %s599 = scalar_lea.sflag [#allocation4], %s598
        %s600 = sand.u32 %s47, 1
        %s601 = smul.addr %s600, 8
        %s602 = scalar_lea.vmem [#allocation3], %s601
        // Predicated region
        $region93: #{tpu_custom_call.1} parent=91 // pred_check
          %p603 = pneg %p60
        $region94: #{tpu_custom_call.1} parent=91 // pred_check_branch
          %605 = sbr.rel (%p603) target = $region96
        $region95: #{tpu_custom_call.1} parent=91 // pred_region
          %606 = dma.done %s599, 128
        $region96: #{tpu_custom_call.1} parent=91 // pred_fallthru
          _
        // Predicated region
        $region97: #{tpu_custom_call.1} parent=91 // pred_check
          %p607 = pneg %p81
        $region98: #{tpu_custom_call.1} parent=91 // pred_check_branch
          %609 = sbr.rel (%p607) target = $region100
        $region99: #{tpu_custom_call.1} parent=91 // pred_region
          %610 = dma.done [#allocation7], 2048
        $region100: #{tpu_custom_call.1} parent=91 // pred_fallthru
          _
        // Predicated region
        $region101: #{tpu_custom_call.1} parent=91 // pred_check
          %p611 = pneg %p165
        $region102: #{tpu_custom_call.1} parent=91 // pred_check_branch
          %613 = sbr.rel (%p611) target = $region104
        $region103: #{tpu_custom_call.1} parent=91 // pred_region
          %614 = dma.done [#allocation7], 2048
        $region104: #{tpu_custom_call.1} parent=91 // pred_fallthru
          _
        // Predicated region
        $region105: #{tpu_custom_call.1} parent=91 // pred_check
          %p615 = pneg %p207
        $region106: #{tpu_custom_call.1} parent=91 // pred_check_branch
          %617 = sbr.rel (%p615) target = $region108
        $region107: #{tpu_custom_call.1} parent=91 // pred_region
          %618 = dma.done [#allocation10], 2048
        $region108: #{tpu_custom_call.1} parent=91 // pred_fallthru
          _
        // Predicated region
        $region109: #{tpu_custom_call.1} parent=91 // pred_check
          %p619 = pneg %p249
        $region110: #{tpu_custom_call.1} parent=91 // pred_check_branch
          %621 = sbr.rel (%p619) target = $region112
        $region111: #{tpu_custom_call.1} parent=91 // pred_region
          %622 = dma.done [#allocation10], 2048
        $region112: #{tpu_custom_call.1} parent=91 // pred_fallthru
          _
        // Predicated region
        $region113: #{tpu_custom_call.1} parent=91 // pred_check
          %p623 = pneg %p291
        $region114: #{tpu_custom_call.1} parent=91 // pred_check_branch
          %625 = sbr.rel (%p623) target = $region116
        $region115: #{tpu_custom_call.1} parent=91 // pred_region
          %626 = dma.done [#allocation13], 2048
        $region116: #{tpu_custom_call.1} parent=91 // pred_fallthru
          _
        // Predicated region
        $region117: #{tpu_custom_call.1} parent=91 // pred_check
          %p627 = pneg %p333
        $region118: #{tpu_custom_call.1} parent=91 // pred_check_branch
          %629 = sbr.rel (%p627) target = $region120
        $region119: #{tpu_custom_call.1} parent=91 // pred_region
          %630 = dma.done [#allocation13], 2048
        $region120: #{tpu_custom_call.1} parent=91 // pred_fallthru
          _
        %s631 = sand.u32 %s47, 1
        %s632 = scalar_lea.sflag [#allocation4], %s631
        %s633 = sand.u32 %s47, 1
        %s634 = smul.addr %s633, 8
        %s635 = scalar_lea.vmem [#allocation3], %s634
        %p636 = pneg %p60
        %p637 = pneg %p57
        %p638 = pneg %p81
        %p639 = pneg %p78
        %p640 = pneg %p102
        %p641 = pneg %p99
        %p642 = pneg %p123
        %p643 = pneg %p120
        %p644 = pneg %p144
        %p645 = pneg %p141
        %p646 = pneg %p165
        %p647 = pneg %p162
        %p648 = pneg %p186
        %p649 = pneg %p183
        %p650 = pneg %p207
        %p651 = pneg %p204
        %p652 = pneg %p228
        %p653 = pneg %p225
        %p654 = pneg %p249
        %p655 = pneg %p246
        %p656 = pneg %p270
        %p657 = pneg %p267
        %p658 = pneg %p291
        %p659 = pneg %p288
        %p660 = pneg %p312
        %p661 = pneg %p309
        %p662 = pneg %p333
        %p663 = pneg %p330
        %p664 = pneg %p354
        %p665 = pneg %p351
        %p666 = pneg %p375
        %p667 = pneg %p372
        %p668 = pneg %p396
        %p669 = pneg %p393
        %p670 = pneg %p417
        %p671 = pneg %p414
        %p672 = pneg %p443
        %p673 = pneg %p440
        %s674 = sand.u32 %s430, 1
        %s675 = scalar_lea.sflag [#allocation5], %s674
        %s676 = sand.u32 %s430, 1
        %s677 = smul.addr %s676, 8
        %s678 = scalar_lea.vmem [#allocation15], %s677
        %v679 = vld [vmem:[%s602] sm:$0xff]
        %v680 = vld [vmem:[#allocation6] sm:$0xff]
        %v681 = vld [vmem:[#allocation6 + $0x8] sm:$0xff]
        %v682 = vld [vmem:[#allocation6 + $0x10] sm:$0xff]
        %v683 = vld [vmem:[#allocation6 + $0x18] sm:$0xff]
        %v684 = vld [vmem:[#allocation6 + $0x20] sm:$0xff]
        %v685 = vld [vmem:[#allocation6 + $0x28] sm:$0xff]
        %v686 = vld [vmem:[#allocation6 + $0x30] sm:$0xff]
        %v687 = vld [vmem:[#allocation6 + $0x38] sm:$0xff]
        %v688 = vld [vmem:[#allocation6 + $0x40] sm:$0xff]
        %v689 = vld [vmem:[#allocation6 + $0x48] sm:$0xff]
        %v690 = vld [vmem:[#allocation6 + $0x50] sm:$0xff]
        %v691 = vld [vmem:[#allocation6 + $0x58] sm:$0xff]
        %v692 = vld [vmem:[#allocation6 + $0x60] sm:$0xff]
        %v693 = vld [vmem:[#allocation6 + $0x68] sm:$0xff]
        %v694 = vld [vmem:[#allocation6 + $0x70] sm:$0xff]
        %v695 = vld [vmem:[#allocation6 + $0x78] sm:$0xff]
        %v696 = vld [vmem:[%s2] sm:$0x1]
        %v698 = vlaneseq
        %v699 = vshrl.u32 %v698, 7
        %v700 = vsub.s32 0, %v699
        %v701 = vrot.slane %v696, %v700
        %703 = vmatprep.subr.mxu0 0.0
        %704 = vmatpush1.msra.mxu0 %v695
        %705 = vmatprep.subr.mxu0 0.0
        %706 = vmatpush1.msra.mxu0 %v694
        %707 = vmatprep.subr.mxu0 0.0
        %708 = vmatpush1.msra.mxu0 %v693
        %709 = vmatprep.subr.mxu0 0.0
        %710 = vmatpush1.msra.mxu0 %v692
        %711 = vmatprep.subr.mxu0 0.0
        %712 = vmatpush1.msra.mxu0 %v691
        %713 = vmatprep.subr.mxu0 0.0
        %714 = vmatpush1.msra.mxu0 %v690
        %715 = vmatprep.subr.mxu0 0.0
        %716 = vmatpush1.msra.mxu0 %v689
        %717 = vmatprep.subr.mxu0 0.0
        %718 = vmatpush1.msra.mxu0 %v688
        %719 = vmatprep.subr.mxu0 0.0
        %720 = vmatpush1.msra.mxu0 %v687
        %721 = vmatprep.subr.mxu0 0.0
        %722 = vmatpush1.msra.mxu0 %v686
        %723 = vmatprep.subr.mxu0 0.0
        %724 = vmatpush1.msra.mxu0 %v685
        %725 = vmatprep.subr.mxu0 0.0
        %726 = vmatpush1.msra.mxu0 %v684
        %727 = vmatprep.subr.mxu0 0.0
        %728 = vmatpush1.msra.mxu0 %v683
        %729 = vmatprep.subr.mxu0 0.0
        %730 = vmatpush1.msra.mxu0 %v682
        %731 = vmatprep.subr.mxu0 0.0
        %732 = vmatpush1.msra.mxu0 %v681
        %733 = vmatprep.subr.mxu0 0.0
        %734 = vmatpush1.msra.mxu0 %v680
        %735 = vmatprep.subr.mxu0 0.0
        %736 = vmatpush2.msra.mxu0 0.0
        %737 = vmatprep.subr.mxu0 0.0
        %738 = vmatpush2.msra.mxu0 0.0
        %739 = vmatprep.subr.mxu0 0.0
        %740 = vmatpush2.msra.mxu0 0.0
        %741 = vmatprep.subr.mxu0 0.0
        %742 = vmatpush2.msra.mxu0 0.0
        %743 = vmatprep.subr.mxu0 0.0
        %744 = vmatpush2.msra.mxu0 0.0
        %745 = vmatprep.subr.mxu0 0.0
        %746 = vmatpush2.msra.mxu0 0.0
        %747 = vmatprep.subr.mxu0 0.0
        %748 = vmatpush2.msra.mxu0 0.0
        %749 = vmatprep.subr.mxu0 0.0
        %750 = vmatpush2.msra.mxu0 0.0
        %751 = vmatprep.subr.mxu0 0.0
        %752 = vmatpush2.msra.mxu0 0.0
        %753 = vmatprep.subr.mxu0 0.0
        %754 = vmatpush2.msra.mxu0 0.0
        %755 = vmatprep.subr.mxu0 0.0
        %756 = vmatpush2.msra.mxu0 0.0
        %757 = vmatprep.subr.mxu0 0.0
        %758 = vmatpush2.msra.mxu0 0.0
        %759 = vmatprep.subr.mxu0 0.0
        %760 = vmatpush2.msra.mxu0 0.0
        %761 = vmatprep.subr.mxu0 0.0
        %762 = vmatpush2.msra.mxu0 0.0
        %763 = vmatprep.subr.mxu0 0.0
        %764 = vmatpush2.msra.mxu0 0.0
        %765 = vmatprep.subr.mxu0 0.0
        %766 = vmatpush2.msra.mxu0 0.0
        %767 = vmatprep.mubr.f32.mxu0 0.0
        %768 = vmatmul.mubr.f32.gmra.mxu0 %v679
        %v769 = vpop.f32.mrf.mxu0
        %v770 = vadd.f32 %v701, %v769
        %v771 = vpop.f32.mrf.mxu0
        %772 = vdwg.mxu0
        %v773 = vsub.f32 0.0, %v770
        %v774 = vmul.f32 %v773, 1.442695
        %v775 = vpow.pop %v774
        %v776 = vadd.f32 %v775, 1.0
        %v777 = vrcp.pop %v776
        %v778 = vmul.f32 %v679, %v777
        %v779 = vld [vmem:[%s3] sm:$0x1]
        %v780 = vld [vmem:[%s4] sm:$0x1]
        %v781 = vadd.f32 %v779, %v780
        %v782 = vmul.f32 %v781, 0.5
        %v784 = vlaneseq
        %v785 = vshrl.u32 %v784, 7
        %v786 = vsub.s32 0, %v785
        %v787 = vrot.slane %v782, %v786
        %v789 = vmul.f32 %v778, %v787
        %v790 = vmul.f32 %v789, %v789
        %v791 = vrot.slane %v790, 4
        %v792 = vadd.f32 %v790, %v791
        %v793 = vrot.slane %v792, 2
        %v794 = vadd.f32 %v792, %v793
        %v795 = vrot.slane %v794, 1
        %v796 = vadd.f32 %v794, %v795
        %v797 = vmax.f32 %v796, 1e-24
        %v798 = vrsqrt.pop %v797
        %v799 = vmul.f32 %v789, %v798
        %800 = vmatprep.subr.mxu0 0.0
        %801 = vmatpush1.xpose.msra.mxu0 0.0
        %802 = vmatprep.subr.mxu0 0.0
        %803 = vmatpush1.xpose.msra.mxu0 0.0
        %804 = vmatprep.subr.mxu0 0.0
        %805 = vmatpush1.xpose.msra.mxu0 0.0
        %806 = vmatprep.subr.mxu0 0.0
        %807 = vmatpush1.xpose.msra.mxu0 0.0
        %808 = vmatprep.subr.mxu0 0.0
        %809 = vmatpush1.xpose.msra.mxu0 0.0
        %810 = vmatprep.subr.mxu0 0.0
        %811 = vmatpush1.xpose.msra.mxu0 0.0
        %812 = vmatprep.subr.mxu0 0.0
        %813 = vmatpush1.xpose.msra.mxu0 0.0
        %814 = vmatprep.subr.mxu0 0.0
        %815 = vmatpush1.xpose.msra.mxu0 0.0
        %816 = vmatprep.subr.mxu0 0.0
        %817 = vmatpush1.xpose.msra.mxu0 0.0
        %818 = vmatprep.subr.mxu0 0.0
        %819 = vmatpush1.xpose.msra.mxu0 0.0
        %820 = vmatprep.subr.mxu0 0.0
        %821 = vmatpush1.xpose.msra.mxu0 0.0
        %822 = vmatprep.subr.mxu0 0.0
        %823 = vmatpush1.xpose.msra.mxu0 0.0
        %824 = vmatprep.subr.mxu0 0.0
        %825 = vmatpush1.xpose.msra.mxu0 0.0
        %826 = vmatprep.subr.mxu0 0.0
        %827 = vmatpush1.xpose.msra.mxu0 0.0
        %828 = vmatprep.subr.mxu0 0.0
        %829 = vmatpush1.xpose.msra.mxu0 0.0
        %830 = vmatprep.subr.mxu0 0.0
        %831 = vmatpush1.xpose.msra.mxu0 %v799
        %832 = vmatprep.subr.mxu0 0.0
        %833 = vmatpush2.xpose.msra.mxu0 0.0
        %834 = vmatprep.subr.mxu0 0.0
        %835 = vmatpush2.xpose.msra.mxu0 0.0
        %836 = vmatprep.subr.mxu0 0.0
        %837 = vmatpush2.xpose.msra.mxu0 0.0
        %838 = vmatprep.subr.mxu0 0.0
        %839 = vmatpush2.xpose.msra.mxu0 0.0
        %840 = vmatprep.subr.mxu0 0.0
        %841 = vmatpush2.xpose.msra.mxu0 0.0
        %842 = vmatprep.subr.mxu0 0.0
        %843 = vmatpush2.xpose.msra.mxu0 0.0
        %844 = vmatprep.subr.mxu0 0.0
        %845 = vmatpush2.xpose.msra.mxu0 0.0
        %846 = vmatprep.subr.mxu0 0.0
        %847 = vmatpush2.xpose.msra.mxu0 0.0
        %848 = vmatprep.subr.mxu0 0.0
        %849 = vmatpush2.xpose.msra.mxu0 0.0
        %850 = vmatprep.subr.mxu0 0.0
        %851 = vmatpush2.xpose.msra.mxu0 0.0
        %852 = vmatprep.subr.mxu0 0.0
        %853 = vmatpush2.xpose.msra.mxu0 0.0
        %854 = vmatprep.subr.mxu0 0.0
        %855 = vmatpush2.xpose.msra.mxu0 0.0
        %856 = vmatprep.subr.mxu0 0.0
        %857 = vmatpush2.xpose.msra.mxu0 0.0
        %858 = vmatprep.subr.mxu0 0.0
        %859 = vmatpush2.xpose.msra.mxu0 0.0
        %860 = vmatprep.subr.mxu0 0.0
        %861 = vmatpush2.xpose.msra.mxu0 0.0
        %862 = vmatprep.subr.mxu0 0.0
        %863 = vmatpush2.xpose.msra.mxu0 0.0
        %864 = vmatprep.mubr.f32.mxu0 0.0
        %865 = vmatmul.mubr.f32.gmra.mxu0 %v799
        %v866 = vpop.f32.mrf.mxu0
        %v867 = vadd.f32 0.0, %v866
        %v868 = vpop.f32.mrf.mxu0
        %869 = vdwg.mxu0
        %vm870 = vcmp.lt.f32.partialorder %v867, 0.0
        %v871 = vsel %vm870, 0.01, %v867
        %s872 = sld [smem:[#allocation2]]
        %v873 = vstv %s872
        %v874 = vmul.f32 %v873, %v871
        %v875 = vld [vmem:[#allocation8] sm:$0xff]
        %v876 = vld [vmem:[#allocation8 + $0x8] sm:$0xff]
        %v877 = vld [vmem:[#allocation8 + $0x10] sm:$0xff]
        %v878 = vld [vmem:[#allocation8 + $0x18] sm:$0xff]
        %v879 = vld [vmem:[#allocation8 + $0x20] sm:$0xff]
        %v880 = vld [vmem:[#allocation8 + $0x28] sm:$0xff]
        %v881 = vld [vmem:[#allocation8 + $0x30] sm:$0xff]
        %v882 = vld [vmem:[#allocation8 + $0x38] sm:$0xff]
        %v883 = vld [vmem:[#allocation8 + $0x40] sm:$0xff]
        %v884 = vld [vmem:[#allocation8 + $0x48] sm:$0xff]
        %v885 = vld [vmem:[#allocation8 + $0x50] sm:$0xff]
        %v886 = vld [vmem:[#allocation8 + $0x58] sm:$0xff]
        %v887 = vld [vmem:[#allocation8 + $0x60] sm:$0xff]
        %v888 = vld [vmem:[#allocation8 + $0x68] sm:$0xff]
        %v889 = vld [vmem:[#allocation8 + $0x70] sm:$0xff]
        %v890 = vld [vmem:[#allocation8 + $0x78] sm:$0xff]
        %v891 = vld [vmem:[%s6] sm:$0x1]
        %v893 = vlaneseq
        %v894 = vshrl.u32 %v893, 7
        %v895 = vsub.s32 0, %v894
        %v896 = vrot.slane %v891, %v895
        %898 = vmatprep.subr.mxu0 0.0
        %899 = vmatpush1.msra.mxu0 %v890
        %900 = vmatprep.subr.mxu0 0.0
        %901 = vmatpush1.msra.mxu0 %v889
        %902 = vmatprep.subr.mxu0 0.0
        %903 = vmatpush1.msra.mxu0 %v888
        %904 = vmatprep.subr.mxu0 0.0
        %905 = vmatpush1.msra.mxu0 %v887
        %906 = vmatprep.subr.mxu0 0.0
        %907 = vmatpush1.msra.mxu0 %v886
        %908 = vmatprep.subr.mxu0 0.0
        %909 = vmatpush1.msra.mxu0 %v885
        %910 = vmatprep.subr.mxu0 0.0
        %911 = vmatpush1.msra.mxu0 %v884
        %912 = vmatprep.subr.mxu0 0.0
        %913 = vmatpush1.msra.mxu0 %v883
        %914 = vmatprep.subr.mxu0 0.0
        %915 = vmatpush1.msra.mxu0 %v882
        %916 = vmatprep.subr.mxu0 0.0
        %917 = vmatpush1.msra.mxu0 %v881
        %918 = vmatprep.subr.mxu0 0.0
        %919 = vmatpush1.msra.mxu0 %v880
        %920 = vmatprep.subr.mxu0 0.0
        %921 = vmatpush1.msra.mxu0 %v879
        %922 = vmatprep.subr.mxu0 0.0
        %923 = vmatpush1.msra.mxu0 %v878
        %924 = vmatprep.subr.mxu0 0.0
        %925 = vmatpush1.msra.mxu0 %v877
        %926 = vmatprep.subr.mxu0 0.0
        %927 = vmatpush1.msra.mxu0 %v876
        %928 = vmatprep.subr.mxu0 0.0
        %929 = vmatpush1.msra.mxu0 %v875
        %930 = vmatprep.subr.mxu0 0.0
        %931 = vmatpush2.msra.mxu0 0.0
        %932 = vmatprep.subr.mxu0 0.0
        %933 = vmatpush2.msra.mxu0 0.0
        %934 = vmatprep.subr.mxu0 0.0
        %935 = vmatpush2.msra.mxu0 0.0
        %936 = vmatprep.subr.mxu0 0.0
        %937 = vmatpush2.msra.mxu0 0.0
        %938 = vmatprep.subr.mxu0 0.0
        %939 = vmatpush2.msra.mxu0 0.0
        %940 = vmatprep.subr.mxu0 0.0
        %941 = vmatpush2.msra.mxu0 0.0
        %942 = vmatprep.subr.mxu0 0.0
        %943 = vmatpush2.msra.mxu0 0.0
        %944 = vmatprep.subr.mxu0 0.0
        %945 = vmatpush2.msra.mxu0 0.0
        %946 = vmatprep.subr.mxu0 0.0
        %947 = vmatpush2.msra.mxu0 0.0
        %948 = vmatprep.subr.mxu0 0.0
        %949 = vmatpush2.msra.mxu0 0.0
        %950 = vmatprep.subr.mxu0 0.0
        %951 = vmatpush2.msra.mxu0 0.0
        %952 = vmatprep.subr.mxu0 0.0
        %953 = vmatpush2.msra.mxu0 0.0
        %954 = vmatprep.subr.mxu0 0.0
        %955 = vmatpush2.msra.mxu0 0.0
        %956 = vmatprep.subr.mxu0 0.0
        %957 = vmatpush2.msra.mxu0 0.0
        %958 = vmatprep.subr.mxu0 0.0
        %959 = vmatpush2.msra.mxu0 0.0
        %960 = vmatprep.subr.mxu0 0.0
        %961 = vmatpush2.msra.mxu0 0.0
        %962 = vmatprep.mubr.f32.mxu0 0.0
        %963 = vmatmul.mubr.f32.gmra.mxu0 %v679
        %v964 = vpop.f32.mrf.mxu0
        %v965 = vadd.f32 %v896, %v964
        %v966 = vpop.f32.mrf.mxu0
        %967 = vdwg.mxu0
        %v968 = vld [vmem:[#allocation9] sm:$0xff]
        %v969 = vld [vmem:[#allocation9 + $0x8] sm:$0xff]
        %v970 = vld [vmem:[#allocation9 + $0x10] sm:$0xff]
        %v971 = vld [vmem:[#allocation9 + $0x18] sm:$0xff]
        %v972 = vld [vmem:[#allocation9 + $0x20] sm:$0xff]
        %v973 = vld [vmem:[#allocation9 + $0x28] sm:$0xff]
        %v974 = vld [vmem:[#allocation9 + $0x30] sm:$0xff]
        %v975 = vld [vmem:[#allocation9 + $0x38] sm:$0xff]
        %v976 = vld [vmem:[#allocation9 + $0x40] sm:$0xff]
        %v977 = vld [vmem:[#allocation9 + $0x48] sm:$0xff]
        %v978 = vld [vmem:[#allocation9 + $0x50] sm:$0xff]
        %v979 = vld [vmem:[#allocation9 + $0x58] sm:$0xff]
        %v980 = vld [vmem:[#allocation9 + $0x60] sm:$0xff]
        %v981 = vld [vmem:[#allocation9 + $0x68] sm:$0xff]
        %v982 = vld [vmem:[#allocation9 + $0x70] sm:$0xff]
        %v983 = vld [vmem:[#allocation9 + $0x78] sm:$0xff]
        %v984 = vld [vmem:[%s8] sm:$0x1]
        %v986 = vlaneseq
        %v987 = vshrl.u32 %v986, 7
        %v988 = vsub.s32 0, %v987
        %v989 = vrot.slane %v984, %v988
        %991 = vmatprep.subr.mxu0 0.0
        %992 = vmatpush1.msra.mxu0 %v983
        %993 = vmatprep.subr.mxu0 0.0
        %994 = vmatpush1.msra.mxu0 %v982
        %995 = vmatprep.subr.mxu0 0.0
        %996 = vmatpush1.msra.mxu0 %v981
        %997 = vmatprep.subr.mxu0 0.0
        %998 = vmatpush1.msra.mxu0 %v980
        %999 = vmatprep.subr.mxu0 0.0
        %1000 = vmatpush1.msra.mxu0 %v979
        %1001 = vmatprep.subr.mxu0 0.0
        %1002 = vmatpush1.msra.mxu0 %v978
        %1003 = vmatprep.subr.mxu0 0.0
        %1004 = vmatpush1.msra.mxu0 %v977
        %1005 = vmatprep.subr.mxu0 0.0
        %1006 = vmatpush1.msra.mxu0 %v976
        %1007 = vmatprep.subr.mxu0 0.0
        %1008 = vmatpush1.msra.mxu0 %v975
        %1009 = vmatprep.subr.mxu0 0.0
        %1010 = vmatpush1.msra.mxu0 %v974
        %1011 = vmatprep.subr.mxu0 0.0
        %1012 = vmatpush1.msra.mxu0 %v973
        %1013 = vmatprep.subr.mxu0 0.0
        %1014 = vmatpush1.msra.mxu0 %v972
        %1015 = vmatprep.subr.mxu0 0.0
        %1016 = vmatpush1.msra.mxu0 %v971
        %1017 = vmatprep.subr.mxu0 0.0
        %1018 = vmatpush1.msra.mxu0 %v970
        %1019 = vmatprep.subr.mxu0 0.0
        %1020 = vmatpush1.msra.mxu0 %v969
        %1021 = vmatprep.subr.mxu0 0.0
        %1022 = vmatpush1.msra.mxu0 %v968
        %1023 = vmatprep.subr.mxu0 0.0
        %1024 = vmatpush2.msra.mxu0 0.0
        %1025 = vmatprep.subr.mxu0 0.0
        %1026 = vmatpush2.msra.mxu0 0.0
        %1027 = vmatprep.subr.mxu0 0.0
        %1028 = vmatpush2.msra.mxu0 0.0
        %1029 = vmatprep.subr.mxu0 0.0
        %1030 = vmatpush2.msra.mxu0 0.0
        %1031 = vmatprep.subr.mxu0 0.0
        %1032 = vmatpush2.msra.mxu0 0.0
        %1033 = vmatprep.subr.mxu0 0.0
        %1034 = vmatpush2.msra.mxu0 0.0
        %1035 = vmatprep.subr.mxu0 0.0
        %1036 = vmatpush2.msra.mxu0 0.0
        %1037 = vmatprep.subr.mxu0 0.0
        %1038 = vmatpush2.msra.mxu0 0.0
        %1039 = vmatprep.subr.mxu0 0.0
        %1040 = vmatpush2.msra.mxu0 0.0
        %1041 = vmatprep.subr.mxu0 0.0
        %1042 = vmatpush2.msra.mxu0 0.0
        %1043 = vmatprep.subr.mxu0 0.0
        %1044 = vmatpush2.msra.mxu0 0.0
        %1045 = vmatprep.subr.mxu0 0.0
        %1046 = vmatpush2.msra.mxu0 0.0
        %1047 = vmatprep.subr.mxu0 0.0
        %1048 = vmatpush2.msra.mxu0 0.0
        %1049 = vmatprep.subr.mxu0 0.0
        %1050 = vmatpush2.msra.mxu0 0.0
        %1051 = vmatprep.subr.mxu0 0.0
        %1052 = vmatpush2.msra.mxu0 0.0
        %1053 = vmatprep.subr.mxu0 0.0
        %1054 = vmatpush2.msra.mxu0 0.0
        %1055 = vmatprep.mubr.f32.mxu0 0.0
        %1056 = vmatmul.mubr.f32.gmra.mxu0 %v679
        %v1057 = vpop.f32.mrf.mxu0
        %v1058 = vadd.f32 %v989, %v1057
        %v1059 = vpop.f32.mrf.mxu0
        %1060 = vdwg.mxu0
        %v1061 = vld [vmem:[#allocation11] sm:$0xff]
        %v1062 = vld [vmem:[#allocation11 + $0x8] sm:$0xff]
        %v1063 = vld [vmem:[#allocation11 + $0x10] sm:$0xff]
        %v1064 = vld [vmem:[#allocation11 + $0x18] sm:$0xff]
        %v1065 = vld [vmem:[#allocation11 + $0x20] sm:$0xff]
        %v1066 = vld [vmem:[#allocation11 + $0x28] sm:$0xff]
        %v1067 = vld [vmem:[#allocation11 + $0x30] sm:$0xff]
        %v1068 = vld [vmem:[#allocation11 + $0x38] sm:$0xff]
        %v1069 = vld [vmem:[#allocation11 + $0x40] sm:$0xff]
        %v1070 = vld [vmem:[#allocation11 + $0x48] sm:$0xff]
        %v1071 = vld [vmem:[#allocation11 + $0x50] sm:$0xff]
        %v1072 = vld [vmem:[#allocation11 + $0x58] sm:$0xff]
        %v1073 = vld [vmem:[#allocation11 + $0x60] sm:$0xff]
        %v1074 = vld [vmem:[#allocation11 + $0x68] sm:$0xff]
        %v1075 = vld [vmem:[#allocation11 + $0x70] sm:$0xff]
        %v1076 = vld [vmem:[#allocation11 + $0x78] sm:$0xff]
        %v1077 = vld [vmem:[%s10] sm:$0x1]
        %v1079 = vlaneseq
        %v1080 = vshrl.u32 %v1079, 7
        %v1081 = vsub.s32 0, %v1080
        %v1082 = vrot.slane %v1077, %v1081
        %1084 = vmatprep.subr.mxu0 0.0
        %1085 = vmatpush1.msra.mxu0 %v1076
        %1086 = vmatprep.subr.mxu0 0.0
        %1087 = vmatpush1.msra.mxu0 %v1075
        %1088 = vmatprep.subr.mxu0 0.0
        %1089 = vmatpush1.msra.mxu0 %v1074
        %1090 = vmatprep.subr.mxu0 0.0
        %1091 = vmatpush1.msra.mxu0 %v1073
        %1092 = vmatprep.subr.mxu0 0.0
        %1093 = vmatpush1.msra.mxu0 %v1072
        %1094 = vmatprep.subr.mxu0 0.0
        %1095 = vmatpush1.msra.mxu0 %v1071
        %1096 = vmatprep.subr.mxu0 0.0
        %1097 = vmatpush1.msra.mxu0 %v1070
        %1098 = vmatprep.subr.mxu0 0.0
        %1099 = vmatpush1.msra.mxu0 %v1069
        %1100 = vmatprep.subr.mxu0 0.0
        %1101 = vmatpush1.msra.mxu0 %v1068
        %1102 = vmatprep.subr.mxu0 0.0
        %1103 = vmatpush1.msra.mxu0 %v1067
        %1104 = vmatprep.subr.mxu0 0.0
        %1105 = vmatpush1.msra.mxu0 %v1066
        %1106 = vmatprep.subr.mxu0 0.0
        %1107 = vmatpush1.msra.mxu0 %v1065
        %1108 = vmatprep.subr.mxu0 0.0
        %1109 = vmatpush1.msra.mxu0 %v1064
        %1110 = vmatprep.subr.mxu0 0.0
        %1111 = vmatpush1.msra.mxu0 %v1063
        %1112 = vmatprep.subr.mxu0 0.0
        %1113 = vmatpush1.msra.mxu0 %v1062
        %1114 = vmatprep.subr.mxu0 0.0
        %1115 = vmatpush1.msra.mxu0 %v1061
        %1116 = vmatprep.subr.mxu0 0.0
        %1117 = vmatpush2.msra.mxu0 0.0
        %1118 = vmatprep.subr.mxu0 0.0
        %1119 = vmatpush2.msra.mxu0 0.0
        %1120 = vmatprep.subr.mxu0 0.0
        %1121 = vmatpush2.msra.mxu0 0.0
        %1122 = vmatprep.subr.mxu0 0.0
        %1123 = vmatpush2.msra.mxu0 0.0
        %1124 = vmatprep.subr.mxu0 0.0
        %1125 = vmatpush2.msra.mxu0 0.0
        %1126 = vmatprep.subr.mxu0 0.0
        %1127 = vmatpush2.msra.mxu0 0.0
        %1128 = vmatprep.subr.mxu0 0.0
        %1129 = vmatpush2.msra.mxu0 0.0
        %1130 = vmatprep.subr.mxu0 0.0
        %1131 = vmatpush2.msra.mxu0 0.0
        %1132 = vmatprep.subr.mxu0 0.0
        %1133 = vmatpush2.msra.mxu0 0.0
        %1134 = vmatprep.subr.mxu0 0.0
        %1135 = vmatpush2.msra.mxu0 0.0
        %1136 = vmatprep.subr.mxu0 0.0
        %1137 = vmatpush2.msra.mxu0 0.0
        %1138 = vmatprep.subr.mxu0 0.0
        %1139 = vmatpush2.msra.mxu0 0.0
        %1140 = vmatprep.subr.mxu0 0.0
        %1141 = vmatpush2.msra.mxu0 0.0
        %1142 = vmatprep.subr.mxu0 0.0
        %1143 = vmatpush2.msra.mxu0 0.0
        %1144 = vmatprep.subr.mxu0 0.0
        %1145 = vmatpush2.msra.mxu0 0.0
        %1146 = vmatprep.subr.mxu0 0.0
        %1147 = vmatpush2.msra.mxu0 0.0
        %1148 = vmatprep.mubr.f32.mxu0 0.0
        %1149 = vmatmul.mubr.f32.gmra.mxu0 %v679
        %v1150 = vpop.f32.mrf.mxu0
        %v1151 = vadd.f32 %v1082, %v1150
        %v1152 = vpop.f32.mrf.mxu0
        %1153 = vdwg.mxu0
        %v1154 = vlaneseq
        %v1155 = vand.u32 %v1154, 127
        %vm1156 = vcmp.ge.s32.totalorder %v1155, 0
        %vm1157 = vcmp.lt.s32.totalorder %v1155, 32
        %vm1158 = vmand %vm1156, %vm1157
        %v1159 = vsel %vm1158, %v1058, 0.0
        %v1160 = vsel %vm1158, %v1151, 0.0
        %1161 = vmatprep.subr.mxu0 0.0
        %1162 = vmatpush1.xpose.msra.mxu0 0.0
        %1163 = vmatprep.subr.mxu0 0.0
        %1164 = vmatpush1.xpose.msra.mxu0 0.0
        %1165 = vmatprep.subr.mxu0 0.0
        %1166 = vmatpush1.xpose.msra.mxu0 0.0
        %1167 = vmatprep.subr.mxu0 0.0
        %1168 = vmatpush1.xpose.msra.mxu0 0.0
        %1169 = vmatprep.subr.mxu0 0.0
        %1170 = vmatpush1.xpose.msra.mxu0 0.0
        %1171 = vmatprep.subr.mxu0 0.0
        %1172 = vmatpush1.xpose.msra.mxu0 0.0
        %1173 = vmatprep.subr.mxu0 0.0
        %1174 = vmatpush1.xpose.msra.mxu0 0.0
        %1175 = vmatprep.subr.mxu0 0.0
        %1176 = vmatpush1.xpose.msra.mxu0 0.0
        %1177 = vmatprep.subr.mxu0 0.0
        %1178 = vmatpush1.xpose.msra.mxu0 0.0
        %1179 = vmatprep.subr.mxu0 0.0
        %1180 = vmatpush1.xpose.msra.mxu0 0.0
        %1181 = vmatprep.subr.mxu0 0.0
        %1182 = vmatpush1.xpose.msra.mxu0 0.0
        %1183 = vmatprep.subr.mxu0 0.0
        %1184 = vmatpush1.xpose.msra.mxu0 0.0
        %1185 = vmatprep.subr.mxu0 0.0
        %1186 = vmatpush1.xpose.msra.mxu0 0.0
        %1187 = vmatprep.subr.mxu0 0.0
        %1188 = vmatpush1.xpose.msra.mxu0 0.0
        %1189 = vmatprep.subr.mxu0 0.0
        %1190 = vmatpush1.xpose.msra.mxu0 0.0
        %1191 = vmatprep.subr.mxu0 0.0
        %1192 = vmatpush1.xpose.msra.mxu0 %v1159
        %1193 = vmatprep.subr.mxu0 0.0
        %1194 = vmatpush2.xpose.msra.mxu0 0.0
        %1195 = vmatprep.subr.mxu0 0.0
        %1196 = vmatpush2.xpose.msra.mxu0 0.0
        %1197 = vmatprep.subr.mxu0 0.0
        %1198 = vmatpush2.xpose.msra.mxu0 0.0
        %1199 = vmatprep.subr.mxu0 0.0
        %1200 = vmatpush2.xpose.msra.mxu0 0.0
        %1201 = vmatprep.subr.mxu0 0.0
        %1202 = vmatpush2.xpose.msra.mxu0 0.0
        %1203 = vmatprep.subr.mxu0 0.0
        %1204 = vmatpush2.xpose.msra.mxu0 0.0
        %1205 = vmatprep.subr.mxu0 0.0
        %1206 = vmatpush2.xpose.msra.mxu0 0.0
        %1207 = vmatprep.subr.mxu0 0.0
        %1208 = vmatpush2.xpose.msra.mxu0 0.0
        %1209 = vmatprep.subr.mxu0 0.0
        %1210 = vmatpush2.xpose.msra.mxu0 0.0
        %1211 = vmatprep.subr.mxu0 0.0
        %1212 = vmatpush2.xpose.msra.mxu0 0.0
        %1213 = vmatprep.subr.mxu0 0.0
        %1214 = vmatpush2.xpose.msra.mxu0 0.0
        %1215 = vmatprep.subr.mxu0 0.0
        %1216 = vmatpush2.xpose.msra.mxu0 0.0
        %1217 = vmatprep.subr.mxu0 0.0
        %1218 = vmatpush2.xpose.msra.mxu0 0.0
        %1219 = vmatprep.subr.mxu0 0.0
        %1220 = vmatpush2.xpose.msra.mxu0 0.0
        %1221 = vmatprep.subr.mxu0 0.0
        %1222 = vmatpush2.xpose.msra.mxu0 0.0
        %1223 = vmatprep.subr.mxu0 0.0
        %1224 = vmatpush2.xpose.msra.mxu0 0.0
        %1225 = vmatprep.mubr.f32.mxu0 0.0
        %1226 = vmatmul.mubr.f32.gmra.mxu0 %v965
        %v1227 = vpop.f32.mrf.mxu0
        %v1228 = vadd.f32 %v874, %v1227
        %v1229 = vpop.f32.mrf.mxu0
        %1230 = vdwg.mxu0
        %vm1231 = vcmask 64512
        %v1232 = vsel %vm1231, %v1228, -inf
        %1233 = vmax.xlane.f32.xlu0 %v1232
        %v1234 = vpop.xlane.xlu0 %1233
        %v1235 = vsub.f32 %v1228, %v1234
        %v1236 = vmul.f32 %v1235, 1.442695
        %v1237 = vpow.pop %v1236
        %v1238 = vsel %vm1231, %v1237, 0.0
        %1239 = vadd.xlane.f32.xlu0 %v1238
        %v1240 = vpop.xlane.xlu0 %1239
        %v1241 = vrcp.pop %v1240
        %v1242 = vmul.f32 %v1237, %v1241
        %vm1243 = vcmp.ge.s32.totalorder %v1155, 32
        %vm1244 = vcmp.lt.s32.totalorder %v1155, 64
        %vm1245 = vmand %vm1243, %vm1244
        %v1246 = vsel %vm1245, %v1058, 0.0
        %v1247 = vsel %vm1245, %v1151, 0.0
        %1248 = vmatprep.subr.mxu0 0.0
        %1249 = vmatpush1.xpose.msra.mxu0 0.0
        %1250 = vmatprep.subr.mxu0 0.0
        %1251 = vmatpush1.xpose.msra.mxu0 0.0
        %1252 = vmatprep.subr.mxu0 0.0
        %1253 = vmatpush1.xpose.msra.mxu0 0.0
        %1254 = vmatprep.subr.mxu0 0.0
        %1255 = vmatpush1.xpose.msra.mxu0 0.0
        %1256 = vmatprep.subr.mxu0 0.0
        %1257 = vmatpush1.xpose.msra.mxu0 0.0
        %1258 = vmatprep.subr.mxu0 0.0
        %1259 = vmatpush1.xpose.msra.mxu0 0.0
        %1260 = vmatprep.subr.mxu0 0.0
        %1261 = vmatpush1.xpose.msra.mxu0 0.0
        %1262 = vmatprep.subr.mxu0 0.0
        %1263 = vmatpush1.xpose.msra.mxu0 0.0
        %1264 = vmatprep.subr.mxu0 0.0
        %1265 = vmatpush1.xpose.msra.mxu0 0.0
        %1266 = vmatprep.subr.mxu0 0.0
        %1267 = vmatpush1.xpose.msra.mxu0 0.0
        %1268 = vmatprep.subr.mxu0 0.0
        %1269 = vmatpush1.xpose.msra.mxu0 0.0
        %1270 = vmatprep.subr.mxu0 0.0
        %1271 = vmatpush1.xpose.msra.mxu0 0.0
        %1272 = vmatprep.subr.mxu0 0.0
        %1273 = vmatpush1.xpose.msra.mxu0 0.0
        %1274 = vmatprep.subr.mxu0 0.0
        %1275 = vmatpush1.xpose.msra.mxu0 0.0
        %1276 = vmatprep.subr.mxu0 0.0
        %1277 = vmatpush1.xpose.msra.mxu0 0.0
        %1278 = vmatprep.subr.mxu0 0.0
        %1279 = vmatpush1.xpose.msra.mxu0 %v1246
        %1280 = vmatprep.subr.mxu0 0.0
        %1281 = vmatpush2.xpose.msra.mxu0 0.0
        %1282 = vmatprep.subr.mxu0 0.0
        %1283 = vmatpush2.xpose.msra.mxu0 0.0
        %1284 = vmatprep.subr.mxu0 0.0
        %1285 = vmatpush2.xpose.msra.mxu0 0.0
        %1286 = vmatprep.subr.mxu0 0.0
        %1287 = vmatpush2.xpose.msra.mxu0 0.0
        %1288 = vmatprep.subr.mxu0 0.0
        %1289 = vmatpush2.xpose.msra.mxu0 0.0
        %1290 = vmatprep.subr.mxu0 0.0
        %1291 = vmatpush2.xpose.msra.mxu0 0.0
        %1292 = vmatprep.subr.mxu0 0.0
        %1293 = vmatpush2.xpose.msra.mxu0 0.0
        %1294 = vmatprep.subr.mxu0 0.0
        %1295 = vmatpush2.xpose.msra.mxu0 0.0
        %1296 = vmatprep.subr.mxu0 0.0
        %1297 = vmatpush2.xpose.msra.mxu0 0.0
        %1298 = vmatprep.subr.mxu0 0.0
        %1299 = vmatpush2.xpose.msra.mxu0 0.0
        %1300 = vmatprep.subr.mxu0 0.0
        %1301 = vmatpush2.xpose.msra.mxu0 0.0
        %1302 = vmatprep.subr.mxu0 0.0
        %1303 = vmatpush2.xpose.msra.mxu0 0.0
        %1304 = vmatprep.subr.mxu0 0.0
        %1305 = vmatpush2.xpose.msra.mxu0 0.0
        %1306 = vmatprep.subr.mxu0 0.0
        %1307 = vmatpush2.xpose.msra.mxu0 0.0
        %1308 = vmatprep.subr.mxu0 0.0
        %1309 = vmatpush2.xpose.msra.mxu0 0.0
        %1310 = vmatprep.subr.mxu0 0.0
        %1311 = vmatpush2.xpose.msra.mxu0 0.0
        %1312 = vmatprep.mubr.f32.mxu0 0.0
        %1313 = vmatmul.mubr.f32.gmra.mxu0 %v965
        %v1314 = vpop.f32.mrf.mxu0
        %v1315 = vadd.f32 %v874, %v1314
        %v1316 = vpop.f32.mrf.mxu0
        %1317 = vdwg.mxu0
        %v1318 = vsel %vm1231, %v1315, -inf
        %1319 = vmax.xlane.f32.xlu0 %v1318
        %v1320 = vpop.xlane.xlu0 %1319
        %v1321 = vsub.f32 %v1315, %v1320
        %v1322 = vmul.f32 %v1321, 1.442695
        %v1323 = vpow.pop %v1322
        %v1324 = vsel %vm1231, %v1323, 0.0
        %1325 = vadd.xlane.f32.xlu0 %v1324
        %v1326 = vpop.xlane.xlu0 %1325
        %v1327 = vrcp.pop %v1326
        %v1328 = vmul.f32 %v1323, %v1327
        %v1330 = vsel %vm1231, %v1328, 0
        %1332 = vmatprep.subr.mxu0 0.0
        %1333 = vmatpush1.msra.mxu0 0.0
        %1334 = vmatprep.subr.mxu0 0.0
        %1335 = vmatpush1.msra.mxu0 0.0
        %1336 = vmatprep.subr.mxu0 0.0
        %1337 = vmatpush1.msra.mxu0 0.0
        %1338 = vmatprep.subr.mxu0 0.0
        %1339 = vmatpush1.msra.mxu0 0.0
        %1340 = vmatprep.subr.mxu0 0.0
        %1341 = vmatpush1.msra.mxu0 0.0
        %1342 = vmatprep.subr.mxu0 0.0
        %1343 = vmatpush1.msra.mxu0 0.0
        %1344 = vmatprep.subr.mxu0 0.0
        %1345 = vmatpush1.msra.mxu0 0.0
        %1346 = vmatprep.subr.mxu0 0.0
        %1347 = vmatpush1.msra.mxu0 0.0
        %1348 = vmatprep.subr.mxu0 0.0
        %1349 = vmatpush1.msra.mxu0 0.0
        %1350 = vmatprep.subr.mxu0 0.0
        %1351 = vmatpush1.msra.mxu0 0.0
        %1352 = vmatprep.subr.mxu0 0.0
        %1353 = vmatpush1.msra.mxu0 0.0
        %1354 = vmatprep.subr.mxu0 0.0
        %1355 = vmatpush1.msra.mxu0 0.0
        %1356 = vmatprep.subr.mxu0 0.0
        %1357 = vmatpush1.msra.mxu0 0.0
        %1358 = vmatprep.subr.mxu0 0.0
        %1359 = vmatpush1.msra.mxu0 0.0
        %1360 = vmatprep.subr.mxu0 0.0
        %1361 = vmatpush1.msra.mxu0 0.0
        %1362 = vmatprep.subr.mxu0 0.0
        %1363 = vmatpush1.msra.mxu0 %v1247
        %1364 = vmatprep.subr.mxu0 0.0
        %1365 = vmatpush2.msra.mxu0 0.0
        %1366 = vmatprep.subr.mxu0 0.0
        %1367 = vmatpush2.msra.mxu0 0.0
        %1368 = vmatprep.subr.mxu0 0.0
        %1369 = vmatpush2.msra.mxu0 0.0
        %1370 = vmatprep.subr.mxu0 0.0
        %1371 = vmatpush2.msra.mxu0 0.0
        %1372 = vmatprep.subr.mxu0 0.0
        %1373 = vmatpush2.msra.mxu0 0.0
        %1374 = vmatprep.subr.mxu0 0.0
        %1375 = vmatpush2.msra.mxu0 0.0
        %1376 = vmatprep.subr.mxu0 0.0
        %1377 = vmatpush2.msra.mxu0 0.0
        %1378 = vmatprep.subr.mxu0 0.0
        %1379 = vmatpush2.msra.mxu0 0.0
        %1380 = vmatprep.subr.mxu0 0.0
        %1381 = vmatpush2.msra.mxu0 0.0
        %1382 = vmatprep.subr.mxu0 0.0
        %1383 = vmatpush2.msra.mxu0 0.0
        %1384 = vmatprep.subr.mxu0 0.0
        %1385 = vmatpush2.msra.mxu0 0.0
        %1386 = vmatprep.subr.mxu0 0.0
        %1387 = vmatpush2.msra.mxu0 0.0
        %1388 = vmatprep.subr.mxu0 0.0
        %1389 = vmatpush2.msra.mxu0 0.0
        %1390 = vmatprep.subr.mxu0 0.0
        %1391 = vmatpush2.msra.mxu0 0.0
        %1392 = vmatprep.subr.mxu0 0.0
        %1393 = vmatpush2.msra.mxu0 0.0
        %1394 = vmatprep.subr.mxu0 0.0
        %1395 = vmatpush2.msra.mxu0 0.0
        %1396 = vmatprep.mubr.f32.mxu0 0.0
        %1397 = vmatmul.mubr.f32.gmra.mxu0 %v1330
        %v1398 = vpop.f32.mrf.mxu0
        %v1399 = vadd.f32 0.0, %v1398
        %v1400 = vpop.f32.mrf.mxu0
        %1401 = vdwg.mxu0
        %v1403 = vsel %vm1231, %v1242, 0
        %1405 = vmatprep.subr.mxu0 0.0
        %1406 = vmatpush1.msra.mxu0 0.0
        %1407 = vmatprep.subr.mxu0 0.0
        %1408 = vmatpush1.msra.mxu0 0.0
        %1409 = vmatprep.subr.mxu0 0.0
        %1410 = vmatpush1.msra.mxu0 0.0
        %1411 = vmatprep.subr.mxu0 0.0
        %1412 = vmatpush1.msra.mxu0 0.0
        %1413 = vmatprep.subr.mxu0 0.0
        %1414 = vmatpush1.msra.mxu0 0.0
        %1415 = vmatprep.subr.mxu0 0.0
        %1416 = vmatpush1.msra.mxu0 0.0
        %1417 = vmatprep.subr.mxu0 0.0
        %1418 = vmatpush1.msra.mxu0 0.0
        %1419 = vmatprep.subr.mxu0 0.0
        %1420 = vmatpush1.msra.mxu0 0.0
        %1421 = vmatprep.subr.mxu0 0.0
        %1422 = vmatpush1.msra.mxu0 0.0
        %1423 = vmatprep.subr.mxu0 0.0
        %1424 = vmatpush1.msra.mxu0 0.0
        %1425 = vmatprep.subr.mxu0 0.0
        %1426 = vmatpush1.msra.mxu0 0.0
        %1427 = vmatprep.subr.mxu0 0.0
        %1428 = vmatpush1.msra.mxu0 0.0
        %1429 = vmatprep.subr.mxu0 0.0
        %1430 = vmatpush1.msra.mxu0 0.0
        %1431 = vmatprep.subr.mxu0 0.0
        %1432 = vmatpush1.msra.mxu0 0.0
        %1433 = vmatprep.subr.mxu0 0.0
        %1434 = vmatpush1.msra.mxu0 0.0
        %1435 = vmatprep.subr.mxu0 0.0
        %1436 = vmatpush1.msra.mxu0 %v1160
        %1437 = vmatprep.subr.mxu0 0.0
        %1438 = vmatpush2.msra.mxu0 0.0
        %1439 = vmatprep.subr.mxu0 0.0
        %1440 = vmatpush2.msra.mxu0 0.0
        %1441 = vmatprep.subr.mxu0 0.0
        %1442 = vmatpush2.msra.mxu0 0.0
        %1443 = vmatprep.subr.mxu0 0.0
        %1444 = vmatpush2.msra.mxu0 0.0
        %1445 = vmatprep.subr.mxu0 0.0
        %1446 = vmatpush2.msra.mxu0 0.0
        %1447 = vmatprep.subr.mxu0 0.0
        %1448 = vmatpush2.msra.mxu0 0.0
        %1449 = vmatprep.subr.mxu0 0.0
        %1450 = vmatpush2.msra.mxu0 0.0
        %1451 = vmatprep.subr.mxu0 0.0
        %1452 = vmatpush2.msra.mxu0 0.0
        %1453 = vmatprep.subr.mxu0 0.0
        %1454 = vmatpush2.msra.mxu0 0.0
        %1455 = vmatprep.subr.mxu0 0.0
        %1456 = vmatpush2.msra.mxu0 0.0
        %1457 = vmatprep.subr.mxu0 0.0
        %1458 = vmatpush2.msra.mxu0 0.0
        %1459 = vmatprep.subr.mxu0 0.0
        %1460 = vmatpush2.msra.mxu0 0.0
        %1461 = vmatprep.subr.mxu0 0.0
        %1462 = vmatpush2.msra.mxu0 0.0
        %1463 = vmatprep.subr.mxu0 0.0
        %1464 = vmatpush2.msra.mxu0 0.0
        %1465 = vmatprep.subr.mxu0 0.0
        %1466 = vmatpush2.msra.mxu0 0.0
        %1467 = vmatprep.subr.mxu0 0.0
        %1468 = vmatpush2.msra.mxu0 0.0
        %1469 = vmatprep.mubr.f32.mxu0 0.0
        %1470 = vmatmul.mubr.f32.gmra.mxu0 %v1403
        %v1471 = vpop.f32.mrf.mxu0
        %v1472 = vadd.f32 %v1399, %v1471
        %v1473 = vpop.f32.mrf.mxu0
        %1474 = vdwg.mxu0
        %vm1475 = vcmp.ge.s32.totalorder %v1155, 64
        %vm1476 = vcmp.lt.s32.totalorder %v1155, 96
        %vm1477 = vmand %vm1475, %vm1476
        %v1478 = vsel %vm1477, %v1058, 0.0
        %v1479 = vsel %vm1477, %v1151, 0.0
        %1480 = vmatprep.subr.mxu0 0.0
        %1481 = vmatpush1.xpose.msra.mxu0 0.0
        %1482 = vmatprep.subr.mxu0 0.0
        %1483 = vmatpush1.xpose.msra.mxu0 0.0
        %1484 = vmatprep.subr.mxu0 0.0
        %1485 = vmatpush1.xpose.msra.mxu0 0.0
        %1486 = vmatprep.subr.mxu0 0.0
        %1487 = vmatpush1.xpose.msra.mxu0 0.0
        %1488 = vmatprep.subr.mxu0 0.0
        %1489 = vmatpush1.xpose.msra.mxu0 0.0
        %1490 = vmatprep.subr.mxu0 0.0
        %1491 = vmatpush1.xpose.msra.mxu0 0.0
        %1492 = vmatprep.subr.mxu0 0.0
        %1493 = vmatpush1.xpose.msra.mxu0 0.0
        %1494 = vmatprep.subr.mxu0 0.0
        %1495 = vmatpush1.xpose.msra.mxu0 0.0
        %1496 = vmatprep.subr.mxu0 0.0
        %1497 = vmatpush1.xpose.msra.mxu0 0.0
        %1498 = vmatprep.subr.mxu0 0.0
        %1499 = vmatpush1.xpose.msra.mxu0 0.0
        %1500 = vmatprep.subr.mxu0 0.0
        %1501 = vmatpush1.xpose.msra.mxu0 0.0
        %1502 = vmatprep.subr.mxu0 0.0
        %1503 = vmatpush1.xpose.msra.mxu0 0.0
        %1504 = vmatprep.subr.mxu0 0.0
        %1505 = vmatpush1.xpose.msra.mxu0 0.0
        %1506 = vmatprep.subr.mxu0 0.0
        %1507 = vmatpush1.xpose.msra.mxu0 0.0
        %1508 = vmatprep.subr.mxu0 0.0
        %1509 = vmatpush1.xpose.msra.mxu0 0.0
        %1510 = vmatprep.subr.mxu0 0.0
        %1511 = vmatpush1.xpose.msra.mxu0 %v1478
        %1512 = vmatprep.subr.mxu0 0.0
        %1513 = vmatpush2.xpose.msra.mxu0 0.0
        %1514 = vmatprep.subr.mxu0 0.0
        %1515 = vmatpush2.xpose.msra.mxu0 0.0
        %1516 = vmatprep.subr.mxu0 0.0
        %1517 = vmatpush2.xpose.msra.mxu0 0.0
        %1518 = vmatprep.subr.mxu0 0.0
        %1519 = vmatpush2.xpose.msra.mxu0 0.0
        %1520 = vmatprep.subr.mxu0 0.0
        %1521 = vmatpush2.xpose.msra.mxu0 0.0
        %1522 = vmatprep.subr.mxu0 0.0
        %1523 = vmatpush2.xpose.msra.mxu0 0.0
        %1524 = vmatprep.subr.mxu0 0.0
        %1525 = vmatpush2.xpose.msra.mxu0 0.0
        %1526 = vmatprep.subr.mxu0 0.0
        %1527 = vmatpush2.xpose.msra.mxu0 0.0
        %1528 = vmatprep.subr.mxu0 0.0
        %1529 = vmatpush2.xpose.msra.mxu0 0.0
        %1530 = vmatprep.subr.mxu0 0.0
        %1531 = vmatpush2.xpose.msra.mxu0 0.0
        %1532 = vmatprep.subr.mxu0 0.0
        %1533 = vmatpush2.xpose.msra.mxu0 0.0
        %1534 = vmatprep.subr.mxu0 0.0
        %1535 = vmatpush2.xpose.msra.mxu0 0.0
        %1536 = vmatprep.subr.mxu0 0.0
        %1537 = vmatpush2.xpose.msra.mxu0 0.0
        %1538 = vmatprep.subr.mxu0 0.0
        %1539 = vmatpush2.xpose.msra.mxu0 0.0
        %1540 = vmatprep.subr.mxu0 0.0
        %1541 = vmatpush2.xpose.msra.mxu0 0.0
        %1542 = vmatprep.subr.mxu0 0.0
        %1543 = vmatpush2.xpose.msra.mxu0 0.0
        %1544 = vmatprep.mubr.f32.mxu0 0.0
        %1545 = vmatmul.mubr.f32.gmra.mxu0 %v965
        %v1546 = vpop.f32.mrf.mxu0
        %v1547 = vadd.f32 %v874, %v1546
        %v1548 = vpop.f32.mrf.mxu0
        %1549 = vdwg.mxu0
        %v1550 = vsel %vm1231, %v1547, -inf
        %1551 = vmax.xlane.f32.xlu0 %v1550
        %v1552 = vpop.xlane.xlu0 %1551
        %v1553 = vsub.f32 %v1547, %v1552
        %v1554 = vmul.f32 %v1553, 1.442695
        %v1555 = vpow.pop %v1554
        %v1556 = vsel %vm1231, %v1555, 0.0
        %1557 = vadd.xlane.f32.xlu0 %v1556
        %v1558 = vpop.xlane.xlu0 %1557
        %v1559 = vrcp.pop %v1558
        %v1560 = vmul.f32 %v1555, %v1559
        %v1562 = vsel %vm1231, %v1560, 0
        %1564 = vmatprep.subr.mxu0 0.0
        %1565 = vmatpush1.msra.mxu0 0.0
        %1566 = vmatprep.subr.mxu0 0.0
        %1567 = vmatpush1.msra.mxu0 0.0
        %1568 = vmatprep.subr.mxu0 0.0
        %1569 = vmatpush1.msra.mxu0 0.0
        %1570 = vmatprep.subr.mxu0 0.0
        %1571 = vmatpush1.msra.mxu0 0.0
        %1572 = vmatprep.subr.mxu0 0.0
        %1573 = vmatpush1.msra.mxu0 0.0
        %1574 = vmatprep.subr.mxu0 0.0
        %1575 = vmatpush1.msra.mxu0 0.0
        %1576 = vmatprep.subr.mxu0 0.0
        %1577 = vmatpush1.msra.mxu0 0.0
        %1578 = vmatprep.subr.mxu0 0.0
        %1579 = vmatpush1.msra.mxu0 0.0
        %1580 = vmatprep.subr.mxu0 0.0
        %1581 = vmatpush1.msra.mxu0 0.0
        %1582 = vmatprep.subr.mxu0 0.0
        %1583 = vmatpush1.msra.mxu0 0.0
        %1584 = vmatprep.subr.mxu0 0.0
        %1585 = vmatpush1.msra.mxu0 0.0
        %1586 = vmatprep.subr.mxu0 0.0
        %1587 = vmatpush1.msra.mxu0 0.0
        %1588 = vmatprep.subr.mxu0 0.0
        %1589 = vmatpush1.msra.mxu0 0.0
        %1590 = vmatprep.subr.mxu0 0.0
        %1591 = vmatpush1.msra.mxu0 0.0
        %1592 = vmatprep.subr.mxu0 0.0
        %1593 = vmatpush1.msra.mxu0 0.0
        %1594 = vmatprep.subr.mxu0 0.0
        %1595 = vmatpush1.msra.mxu0 %v1479
        %1596 = vmatprep.subr.mxu0 0.0
        %1597 = vmatpush2.msra.mxu0 0.0
        %1598 = vmatprep.subr.mxu0 0.0
        %1599 = vmatpush2.msra.mxu0 0.0
        %1600 = vmatprep.subr.mxu0 0.0
        %1601 = vmatpush2.msra.mxu0 0.0
        %1602 = vmatprep.subr.mxu0 0.0
        %1603 = vmatpush2.msra.mxu0 0.0
        %1604 = vmatprep.subr.mxu0 0.0
        %1605 = vmatpush2.msra.mxu0 0.0
        %1606 = vmatprep.subr.mxu0 0.0
        %1607 = vmatpush2.msra.mxu0 0.0
        %1608 = vmatprep.subr.mxu0 0.0
        %1609 = vmatpush2.msra.mxu0 0.0
        %1610 = vmatprep.subr.mxu0 0.0
        %1611 = vmatpush2.msra.mxu0 0.0
        %1612 = vmatprep.subr.mxu0 0.0
        %1613 = vmatpush2.msra.mxu0 0.0
        %1614 = vmatprep.subr.mxu0 0.0
        %1615 = vmatpush2.msra.mxu0 0.0
        %1616 = vmatprep.subr.mxu0 0.0
        %1617 = vmatpush2.msra.mxu0 0.0
        %1618 = vmatprep.subr.mxu0 0.0
        %1619 = vmatpush2.msra.mxu0 0.0
        %1620 = vmatprep.subr.mxu0 0.0
        %1621 = vmatpush2.msra.mxu0 0.0
        %1622 = vmatprep.subr.mxu0 0.0
        %1623 = vmatpush2.msra.mxu0 0.0
        %1624 = vmatprep.subr.mxu0 0.0
        %1625 = vmatpush2.msra.mxu0 0.0
        %1626 = vmatprep.subr.mxu0 0.0
        %1627 = vmatpush2.msra.mxu0 0.0
        %1628 = vmatprep.mubr.f32.mxu0 0.0
        %1629 = vmatmul.mubr.f32.gmra.mxu0 %v1562
        %v1630 = vpop.f32.mrf.mxu0
        %v1631 = vadd.f32 0.0, %v1630
        %v1632 = vpop.f32.mrf.mxu0
        %1633 = vdwg.mxu0
        %v1634 = vadd.f32 %v1472, %v1631
        %vm1635 = vcmp.ge.s32.totalorder %v1155, 96
        %vm1636 = vcmp.lt.s32.totalorder %v1155, 128
        %vm1637 = vmand %vm1635, %vm1636
        %v1638 = vsel %vm1637, %v1058, 0.0
        %v1639 = vsel %vm1637, %v1151, 0.0
        %1640 = vmatprep.subr.mxu0 0.0
        %1641 = vmatpush1.xpose.msra.mxu0 0.0
        %1642 = vmatprep.subr.mxu0 0.0
        %1643 = vmatpush1.xpose.msra.mxu0 0.0
        %1644 = vmatprep.subr.mxu0 0.0
        %1645 = vmatpush1.xpose.msra.mxu0 0.0
        %1646 = vmatprep.subr.mxu0 0.0
        %1647 = vmatpush1.xpose.msra.mxu0 0.0
        %1648 = vmatprep.subr.mxu0 0.0
        %1649 = vmatpush1.xpose.msra.mxu0 0.0
        %1650 = vmatprep.subr.mxu0 0.0
        %1651 = vmatpush1.xpose.msra.mxu0 0.0
        %1652 = vmatprep.subr.mxu0 0.0
        %1653 = vmatpush1.xpose.msra.mxu0 0.0
        %1654 = vmatprep.subr.mxu0 0.0
        %1655 = vmatpush1.xpose.msra.mxu0 0.0
        %1656 = vmatprep.subr.mxu0 0.0
        %1657 = vmatpush1.xpose.msra.mxu0 0.0
        %1658 = vmatprep.subr.mxu0 0.0
        %1659 = vmatpush1.xpose.msra.mxu0 0.0
        %1660 = vmatprep.subr.mxu0 0.0
        %1661 = vmatpush1.xpose.msra.mxu0 0.0
        %1662 = vmatprep.subr.mxu0 0.0
        %1663 = vmatpush1.xpose.msra.mxu0 0.0
        %1664 = vmatprep.subr.mxu0 0.0
        %1665 = vmatpush1.xpose.msra.mxu0 0.0
        %1666 = vmatprep.subr.mxu0 0.0
        %1667 = vmatpush1.xpose.msra.mxu0 0.0
        %1668 = vmatprep.subr.mxu0 0.0
        %1669 = vmatpush1.xpose.msra.mxu0 0.0
        %1670 = vmatprep.subr.mxu0 0.0
        %1671 = vmatpush1.xpose.msra.mxu0 %v1638
        %1672 = vmatprep.subr.mxu0 0.0
        %1673 = vmatpush2.xpose.msra.mxu0 0.0
        %1674 = vmatprep.subr.mxu0 0.0
        %1675 = vmatpush2.xpose.msra.mxu0 0.0
        %1676 = vmatprep.subr.mxu0 0.0
        %1677 = vmatpush2.xpose.msra.mxu0 0.0
        %1678 = vmatprep.subr.mxu0 0.0
        %1679 = vmatpush2.xpose.msra.mxu0 0.0
        %1680 = vmatprep.subr.mxu0 0.0
        %1681 = vmatpush2.xpose.msra.mxu0 0.0
        %1682 = vmatprep.subr.mxu0 0.0
        %1683 = vmatpush2.xpose.msra.mxu0 0.0
        %1684 = vmatprep.subr.mxu0 0.0
        %1685 = vmatpush2.xpose.msra.mxu0 0.0
        %1686 = vmatprep.subr.mxu0 0.0
        %1687 = vmatpush2.xpose.msra.mxu0 0.0
        %1688 = vmatprep.subr.mxu0 0.0
        %1689 = vmatpush2.xpose.msra.mxu0 0.0
        %1690 = vmatprep.subr.mxu0 0.0
        %1691 = vmatpush2.xpose.msra.mxu0 0.0
        %1692 = vmatprep.subr.mxu0 0.0
        %1693 = vmatpush2.xpose.msra.mxu0 0.0
        %1694 = vmatprep.subr.mxu0 0.0
        %1695 = vmatpush2.xpose.msra.mxu0 0.0
        %1696 = vmatprep.subr.mxu0 0.0
        %1697 = vmatpush2.xpose.msra.mxu0 0.0
        %1698 = vmatprep.subr.mxu0 0.0
        %1699 = vmatpush2.xpose.msra.mxu0 0.0
        %1700 = vmatprep.subr.mxu0 0.0
        %1701 = vmatpush2.xpose.msra.mxu0 0.0
        %1702 = vmatprep.subr.mxu0 0.0
        %1703 = vmatpush2.xpose.msra.mxu0 0.0
        %1704 = vmatprep.mubr.f32.mxu0 0.0
        %1705 = vmatmul.mubr.f32.gmra.mxu0 %v965
        %v1706 = vpop.f32.mrf.mxu0
        %v1707 = vadd.f32 %v874, %v1706
        %v1708 = vpop.f32.mrf.mxu0
        %1709 = vdwg.mxu0
        %v1710 = vsel %vm1231, %v1707, -inf
        %1711 = vmax.xlane.f32.xlu0 %v1710
        %v1712 = vpop.xlane.xlu0 %1711
        %v1713 = vsub.f32 %v1707, %v1712
        %v1714 = vmul.f32 %v1713, 1.442695
        %v1715 = vpow.pop %v1714
        %v1716 = vsel %vm1231, %v1715, 0.0
        %1717 = vadd.xlane.f32.xlu0 %v1716
        %v1718 = vpop.xlane.xlu0 %1717
        %v1719 = vrcp.pop %v1718
        %v1720 = vmul.f32 %v1715, %v1719
        %v1722 = vsel %vm1231, %v1720, 0
        %1724 = vmatprep.subr.mxu0 0.0
        %1725 = vmatpush1.msra.mxu0 0.0
        %1726 = vmatprep.subr.mxu0 0.0
        %1727 = vmatpush1.msra.mxu0 0.0
        %1728 = vmatprep.subr.mxu0 0.0
        %1729 = vmatpush1.msra.mxu0 0.0
        %1730 = vmatprep.subr.mxu0 0.0
        %1731 = vmatpush1.msra.mxu0 0.0
        %1732 = vmatprep.subr.mxu0 0.0
        %1733 = vmatpush1.msra.mxu0 0.0
        %1734 = vmatprep.subr.mxu0 0.0
        %1735 = vmatpush1.msra.mxu0 0.0
        %1736 = vmatprep.subr.mxu0 0.0
        %1737 = vmatpush1.msra.mxu0 0.0
        %1738 = vmatprep.subr.mxu0 0.0
        %1739 = vmatpush1.msra.mxu0 0.0
        %1740 = vmatprep.subr.mxu0 0.0
        %1741 = vmatpush1.msra.mxu0 0.0
        %1742 = vmatprep.subr.mxu0 0.0
        %1743 = vmatpush1.msra.mxu0 0.0
        %1744 = vmatprep.subr.mxu0 0.0
        %1745 = vmatpush1.msra.mxu0 0.0
        %1746 = vmatprep.subr.mxu0 0.0
        %1747 = vmatpush1.msra.mxu0 0.0
        %1748 = vmatprep.subr.mxu0 0.0
        %1749 = vmatpush1.msra.mxu0 0.0
        %1750 = vmatprep.subr.mxu0 0.0
        %1751 = vmatpush1.msra.mxu0 0.0
        %1752 = vmatprep.subr.mxu0 0.0
        %1753 = vmatpush1.msra.mxu0 0.0
        %1754 = vmatprep.subr.mxu0 0.0
        %1755 = vmatpush1.msra.mxu0 %v1639
        %1756 = vmatprep.subr.mxu0 0.0
        %1757 = vmatpush2.msra.mxu0 0.0
        %1758 = vmatprep.subr.mxu0 0.0
        %1759 = vmatpush2.msra.mxu0 0.0
        %1760 = vmatprep.subr.mxu0 0.0
        %1761 = vmatpush2.msra.mxu0 0.0
        %1762 = vmatprep.subr.mxu0 0.0
        %1763 = vmatpush2.msra.mxu0 0.0
        %1764 = vmatprep.subr.mxu0 0.0
        %1765 = vmatpush2.msra.mxu0 0.0
        %1766 = vmatprep.subr.mxu0 0.0
        %1767 = vmatpush2.msra.mxu0 0.0
        %1768 = vmatprep.subr.mxu0 0.0
        %1769 = vmatpush2.msra.mxu0 0.0
        %1770 = vmatprep.subr.mxu0 0.0
        %1771 = vmatpush2.msra.mxu0 0.0
        %1772 = vmatprep.subr.mxu0 0.0
        %1773 = vmatpush2.msra.mxu0 0.0
        %1774 = vmatprep.subr.mxu0 0.0
        %1775 = vmatpush2.msra.mxu0 0.0
        %1776 = vmatprep.subr.mxu0 0.0
        %1777 = vmatpush2.msra.mxu0 0.0
        %1778 = vmatprep.subr.mxu0 0.0
        %1779 = vmatpush2.msra.mxu0 0.0
        %1780 = vmatprep.subr.mxu0 0.0
        %1781 = vmatpush2.msra.mxu0 0.0
        %1782 = vmatprep.subr.mxu0 0.0
        %1783 = vmatpush2.msra.mxu0 0.0
        %1784 = vmatprep.subr.mxu0 0.0
        %1785 = vmatpush2.msra.mxu0 0.0
        %1786 = vmatprep.subr.mxu0 0.0
        %1787 = vmatpush2.msra.mxu0 0.0
        %1788 = vmatprep.mubr.f32.mxu0 0.0
        %1789 = vmatmul.mubr.f32.gmra.mxu0 %v1722
        %v1790 = vpop.f32.mrf.mxu0
        %v1791 = vadd.f32 0.0, %v1790
        %v1792 = vpop.f32.mrf.mxu0
        %1793 = vdwg.mxu0
        %v1794 = vadd.f32 %v1634, %v1791
        %v1795 = vld [vmem:[#allocation12] sm:$0xff]
        %v1796 = vld [vmem:[#allocation12 + $0x8] sm:$0xff]
        %v1797 = vld [vmem:[#allocation12 + $0x10] sm:$0xff]
        %v1798 = vld [vmem:[#allocation12 + $0x18] sm:$0xff]
        %v1799 = vld [vmem:[#allocation12 + $0x20] sm:$0xff]
        %v1800 = vld [vmem:[#allocation12 + $0x28] sm:$0xff]
        %v1801 = vld [vmem:[#allocation12 + $0x30] sm:$0xff]
        %v1802 = vld [vmem:[#allocation12 + $0x38] sm:$0xff]
        %v1803 = vld [vmem:[#allocation12 + $0x40] sm:$0xff]
        %v1804 = vld [vmem:[#allocation12 + $0x48] sm:$0xff]
        %v1805 = vld [vmem:[#allocation12 + $0x50] sm:$0xff]
        %v1806 = vld [vmem:[#allocation12 + $0x58] sm:$0xff]
        %v1807 = vld [vmem:[#allocation12 + $0x60] sm:$0xff]
        %v1808 = vld [vmem:[#allocation12 + $0x68] sm:$0xff]
        %v1809 = vld [vmem:[#allocation12 + $0x70] sm:$0xff]
        %v1810 = vld [vmem:[#allocation12 + $0x78] sm:$0xff]
        %v1811 = vld [vmem:[%s12] sm:$0x1]
        %v1813 = vlaneseq
        %v1814 = vshrl.u32 %v1813, 7
        %v1815 = vsub.s32 0, %v1814
        %v1816 = vrot.slane %v1811, %v1815
        %1818 = vmatprep.subr.mxu0 0.0
        %1819 = vmatpush1.msra.mxu0 %v1810
        %1820 = vmatprep.subr.mxu0 0.0
        %1821 = vmatpush1.msra.mxu0 %v1809
        %1822 = vmatprep.subr.mxu0 0.0
        %1823 = vmatpush1.msra.mxu0 %v1808
        %1824 = vmatprep.subr.mxu0 0.0
        %1825 = vmatpush1.msra.mxu0 %v1807
        %1826 = vmatprep.subr.mxu0 0.0
        %1827 = vmatpush1.msra.mxu0 %v1806
        %1828 = vmatprep.subr.mxu0 0.0
        %1829 = vmatpush1.msra.mxu0 %v1805
        %1830 = vmatprep.subr.mxu0 0.0
        %1831 = vmatpush1.msra.mxu0 %v1804
        %1832 = vmatprep.subr.mxu0 0.0
        %1833 = vmatpush1.msra.mxu0 %v1803
        %1834 = vmatprep.subr.mxu0 0.0
        %1835 = vmatpush1.msra.mxu0 %v1802
        %1836 = vmatprep.subr.mxu0 0.0
        %1837 = vmatpush1.msra.mxu0 %v1801
        %1838 = vmatprep.subr.mxu0 0.0
        %1839 = vmatpush1.msra.mxu0 %v1800
        %1840 = vmatprep.subr.mxu0 0.0
        %1841 = vmatpush1.msra.mxu0 %v1799
        %1842 = vmatprep.subr.mxu0 0.0
        %1843 = vmatpush1.msra.mxu0 %v1798
        %1844 = vmatprep.subr.mxu0 0.0
        %1845 = vmatpush1.msra.mxu0 %v1797
        %1846 = vmatprep.subr.mxu0 0.0
        %1847 = vmatpush1.msra.mxu0 %v1796
        %1848 = vmatprep.subr.mxu0 0.0
        %1849 = vmatpush1.msra.mxu0 %v1795
        %1850 = vmatprep.subr.mxu0 0.0
        %1851 = vmatpush2.msra.mxu0 0.0
        %1852 = vmatprep.subr.mxu0 0.0
        %1853 = vmatpush2.msra.mxu0 0.0
        %1854 = vmatprep.subr.mxu0 0.0
        %1855 = vmatpush2.msra.mxu0 0.0
        %1856 = vmatprep.subr.mxu0 0.0
        %1857 = vmatpush2.msra.mxu0 0.0
        %1858 = vmatprep.subr.mxu0 0.0
        %1859 = vmatpush2.msra.mxu0 0.0
        %1860 = vmatprep.subr.mxu0 0.0
        %1861 = vmatpush2.msra.mxu0 0.0
        %1862 = vmatprep.subr.mxu0 0.0
        %1863 = vmatpush2.msra.mxu0 0.0
        %1864 = vmatprep.subr.mxu0 0.0
        %1865 = vmatpush2.msra.mxu0 0.0
        %1866 = vmatprep.subr.mxu0 0.0
        %1867 = vmatpush2.msra.mxu0 0.0
        %1868 = vmatprep.subr.mxu0 0.0
        %1869 = vmatpush2.msra.mxu0 0.0
        %1870 = vmatprep.subr.mxu0 0.0
        %1871 = vmatpush2.msra.mxu0 0.0
        %1872 = vmatprep.subr.mxu0 0.0
        %1873 = vmatpush2.msra.mxu0 0.0
        %1874 = vmatprep.subr.mxu0 0.0
        %1875 = vmatpush2.msra.mxu0 0.0
        %1876 = vmatprep.subr.mxu0 0.0
        %1877 = vmatpush2.msra.mxu0 0.0
        %1878 = vmatprep.subr.mxu0 0.0
        %1879 = vmatpush2.msra.mxu0 0.0
        %1880 = vmatprep.subr.mxu0 0.0
        %1881 = vmatpush2.msra.mxu0 0.0
        %1882 = vmatprep.mubr.f32.mxu0 0.0
        %1883 = vmatmul.mubr.f32.gmra.mxu0 %v1794
        %v1884 = vpop.f32.mrf.mxu0
        %v1885 = vadd.f32 %v1816, %v1884
        %v1886 = vpop.f32.mrf.mxu0
        %1887 = vdwg.mxu0
        %v1888 = vsub.f32 0.0, %v1885
        %v1889 = vmul.f32 %v1888, 1.442695
        %v1890 = vpow.pop %v1889
        %v1891 = vadd.f32 %v1890, 1.0
        %v1892 = vrcp.pop %v1891
        %v1893 = vmul.f32 %v1885, %v1892
        %v1894 = vmul.f32 %v1794, %v1893
        %v1895 = vld [vmem:[#allocation14] sm:$0xff]
        %v1896 = vld [vmem:[#allocation14 + $0x8] sm:$0xff]
        %v1897 = vld [vmem:[#allocation14 + $0x10] sm:$0xff]
        %v1898 = vld [vmem:[#allocation14 + $0x18] sm:$0xff]
        %v1899 = vld [vmem:[#allocation14 + $0x20] sm:$0xff]
        %v1900 = vld [vmem:[#allocation14 + $0x28] sm:$0xff]
        %v1901 = vld [vmem:[#allocation14 + $0x30] sm:$0xff]
        %v1902 = vld [vmem:[#allocation14 + $0x38] sm:$0xff]
        %v1903 = vld [vmem:[#allocation14 + $0x40] sm:$0xff]
        %v1904 = vld [vmem:[#allocation14 + $0x48] sm:$0xff]
        %v1905 = vld [vmem:[#allocation14 + $0x50] sm:$0xff]
        %v1906 = vld [vmem:[#allocation14 + $0x58] sm:$0xff]
        %v1907 = vld [vmem:[#allocation14 + $0x60] sm:$0xff]
        %v1908 = vld [vmem:[#allocation14 + $0x68] sm:$0xff]
        %v1909 = vld [vmem:[#allocation14 + $0x70] sm:$0xff]
        %v1910 = vld [vmem:[#allocation14 + $0x78] sm:$0xff]
        %v1911 = vld [vmem:[%s14] sm:$0x1]
        %v1913 = vlaneseq
        %v1914 = vshrl.u32 %v1913, 7
        %v1915 = vsub.s32 0, %v1914
        %v1916 = vrot.slane %v1911, %v1915
        %1918 = vmatprep.subr.mxu0 0.0
        %1919 = vmatpush1.msra.mxu0 %v1910
        %1920 = vmatprep.subr.mxu0 0.0
        %1921 = vmatpush1.msra.mxu0 %v1909
        %1922 = vmatprep.subr.mxu0 0.0
        %1923 = vmatpush1.msra.mxu0 %v1908
        %1924 = vmatprep.subr.mxu0 0.0
        %1925 = vmatpush1.msra.mxu0 %v1907
        %1926 = vmatprep.subr.mxu0 0.0
        %1927 = vmatpush1.msra.mxu0 %v1906
        %1928 = vmatprep.subr.mxu0 0.0
        %1929 = vmatpush1.msra.mxu0 %v1905
        %1930 = vmatprep.subr.mxu0 0.0
        %1931 = vmatpush1.msra.mxu0 %v1904
        %1932 = vmatprep.subr.mxu0 0.0
        %1933 = vmatpush1.msra.mxu0 %v1903
        %1934 = vmatprep.subr.mxu0 0.0
        %1935 = vmatpush1.msra.mxu0 %v1902
        %1936 = vmatprep.subr.mxu0 0.0
        %1937 = vmatpush1.msra.mxu0 %v1901
        %1938 = vmatprep.subr.mxu0 0.0
        %1939 = vmatpush1.msra.mxu0 %v1900
        %1940 = vmatprep.subr.mxu0 0.0
        %1941 = vmatpush1.msra.mxu0 %v1899
        %1942 = vmatprep.subr.mxu0 0.0
        %1943 = vmatpush1.msra.mxu0 %v1898
        %1944 = vmatprep.subr.mxu0 0.0
        %1945 = vmatpush1.msra.mxu0 %v1897
        %1946 = vmatprep.subr.mxu0 0.0
        %1947 = vmatpush1.msra.mxu0 %v1896
        %1948 = vmatprep.subr.mxu0 0.0
        %1949 = vmatpush1.msra.mxu0 %v1895
        %1950 = vmatprep.subr.mxu0 0.0
        %1951 = vmatpush2.msra.mxu0 0.0
        %1952 = vmatprep.subr.mxu0 0.0
        %1953 = vmatpush2.msra.mxu0 0.0
        %1954 = vmatprep.subr.mxu0 0.0
        %1955 = vmatpush2.msra.mxu0 0.0
        %1956 = vmatprep.subr.mxu0 0.0
        %1957 = vmatpush2.msra.mxu0 0.0
        %1958 = vmatprep.subr.mxu0 0.0
        %1959 = vmatpush2.msra.mxu0 0.0
        %1960 = vmatprep.subr.mxu0 0.0
        %1961 = vmatpush2.msra.mxu0 0.0
        %1962 = vmatprep.subr.mxu0 0.0
        %1963 = vmatpush2.msra.mxu0 0.0
        %1964 = vmatprep.subr.mxu0 0.0
        %1965 = vmatpush2.msra.mxu0 0.0
        %1966 = vmatprep.subr.mxu0 0.0
        %1967 = vmatpush2.msra.mxu0 0.0
        %1968 = vmatprep.subr.mxu0 0.0
        %1969 = vmatpush2.msra.mxu0 0.0
        %1970 = vmatprep.subr.mxu0 0.0
        %1971 = vmatpush2.msra.mxu0 0.0
        %1972 = vmatprep.subr.mxu0 0.0
        %1973 = vmatpush2.msra.mxu0 0.0
        %1974 = vmatprep.subr.mxu0 0.0
        %1975 = vmatpush2.msra.mxu0 0.0
        %1976 = vmatprep.subr.mxu0 0.0
        %1977 = vmatpush2.msra.mxu0 0.0
        %1978 = vmatprep.subr.mxu0 0.0
        %1979 = vmatpush2.msra.mxu0 0.0
        %1980 = vmatprep.subr.mxu0 0.0
        %1981 = vmatpush2.msra.mxu0 0.0
        %1982 = vmatprep.mubr.f32.mxu0 0.0
        %1983 = vmatmul.mubr.f32.gmra.mxu0 %v1894
        %v1984 = vpop.f32.mrf.mxu0
        %v1985 = vadd.f32 %v1916, %v1984
        %v1986 = vpop.f32.mrf.mxu0
        %1987 = vdwg.mxu0
        %v1988 = vadd.f32 %v1985, %v679
        %1989 = vadd.xlane.f32.xlu0 %v1988
        %v1990 = vpop.xlane.xlu0 %1989
        %v1991 = vrcp.pop 128.0
        %v1992 = vmul.f32 %v1990, %v1991
        %v1993 = vsub.f32 %v1988, %v1992
        %v1994 = vmul.f32 %v1993, %v1993
        %1995 = vadd.xlane.f32.xlu0 %v1994
        %v1996 = vpop.xlane.xlu0 %1995
        %v1997 = vmul.f32 %v1996, %v1991
        %v1998 = vadd.f32 %v1997, 1e-12
        %v1999 = vrsqrt.pop %v1998
        %v2000 = vmul.f32 %v1993, %v1999
        %v2001 = vld [vmem:[%s15] sm:$0x1]
        %v2003 = vlaneseq
        %v2004 = vshrl.u32 %v2003, 7
        %v2005 = vsub.s32 0, %v2004
        %v2006 = vrot.slane %v2001, %v2005
        %v2008 = vmul.f32 %v2000, %v2006
        %v2009 = vld [vmem:[%s16] sm:$0x1]
        %v2011 = vlaneseq
        %v2012 = vshrl.u32 %v2011, 7
        %v2013 = vsub.s32 0, %v2012
        %v2014 = vrot.slane %v2009, %v2013
        %v2016 = vadd.f32 %v2008, %v2014
        %2017 = vst [vmem:[%s678] sm:$0xff] %v2016
        %s2018 = sand.u32 %s430, 1
        %s2019 = scalar_lea.sflag [#allocation5], %s2018
        %s2020 = sand.u32 %s430, 1
        %s2021 = smul.addr %s2020, 8
        %s2022 = scalar_lea.vmem [#allocation15], %s2021
        // Predicated region
        $region121: #{tpu_custom_call.1} parent=91 // pred_check
          %p2023 = pneg %p440
        $region122: #{tpu_custom_call.1} parent=91 // pred_check_branch
          %2025 = sbr.rel (%p2023) target = $region124
        $region123: #{tpu_custom_call.1} parent=91 // pred_region
          %s2027 = ssub.s32 128, 128
          %2028 = vsyncadd %s2019, %s2027
          %s2029 = smul.addr %s39, 128
          %s2030 = scalar_lea.hbm %s18, %s2029
          %s2032 = sshll.u32 %s2022, 4
          %s2033 = int_to_ptr.vmem [resolvable:$true] %s2032
          %2035 = dma.vmem_to_hbm [thread:$0]  %s2033, 128, %s2030, %s2019
        $region124: #{tpu_custom_call.1} parent=91 // pred_fallthru
          _
      $region92: #{tpu_custom_call.1} parent=5 // pred_fallthru
        _
      %p2036 = scmp.le.s32.totalorder 2, %s34
      // Predicated region
      $region125: #{tpu_custom_call.1} parent=5 // pred_check
        %p2037 = pneg %p2036
      $region126: #{tpu_custom_call.1} parent=5 // pred_check_branch
        %2039 = sbr.rel (%p2037) target = $region128
      $region127: #{tpu_custom_call.1} parent=5 // pred_region
        %s2040 = ssub.s32 %s34, 2
        // Predicated region
        $region129: #{tpu_custom_call.1} parent=127 // pred_check
          %p2041 = pneg %p446
        $region130: #{tpu_custom_call.1} parent=127 // pred_check_branch
          %2043 = sbr.rel (%p2041) target = $region132
        $region131: #{tpu_custom_call.1} parent=127 // pred_region
          %s2044 = sand.u32 %s431, 1
          %s2045 = scalar_lea.sflag [#allocation5], %s2044
          %s2046 = sand.u32 %s431, 1
          %s2047 = smul.addr %s2046, 8
          %s2048 = scalar_lea.vmem [#allocation15], %s2047
          %2049 = dma.done %s2045, 128
        $region132: #{tpu_custom_call.1} parent=127 // pred_fallthru
          _
      $region128: #{tpu_custom_call.1} parent=5 // pred_fallthru
        _
    $region6: #{tpu_custom_call.1} parent=1 // loop_footer
      %s38 = sadd.s32 1, %s34
    $region7: #{tpu_custom_call.1} parent=1 // loop_footer_branch
      %33 = sbr.rel target = $region3
    $region8: #{tpu_custom_call.1} parent=1 // loop_exit
      _
    %2050 = vsyncpa [#allocation4], 1
    %s2051 = scalar_lea.sflag [#allocation4], 1
    %2052 = vsyncpa %s2051, 1
    %2053 = vsyncpa [#allocation7], 1
    %2054 = vsyncpa [#allocation10], 1
    %2055 = vsyncpa [#allocation13], 1
    %2056 = vsyncpa [#allocation5], 1
    %s2057 = scalar_lea.sflag [#allocation5], 1
    %2058 = vsyncpa %s2057, 1

</llo_original>
